<compile_context>
chip_gen: v6e
topology: v6e:2x2x1
jax: 0.10.0
libtpu: 0.0.40
codegen_flags: <defaults>
</compile_context>

<pallas_src>
import jax
import jax.numpy as jnp
import numpy as np
from jax import lax
from jax.experimental import pallas as pl
from jax.experimental.pallas import tpu as pltpu

# --- synthetic sizes (stand-in for len(REL_FEATURES)) ------------------------
N_FEATURES = 16                       # len(REL_FEATURES)
HIDDEN = round(N_FEATURES / 2)        # 8
SEQ = 8                               # "week_size"
GATES = 4 * HIDDEN                    # 32
LANES = 128                           # lane-padded slab width

# --- packed-parameter slab layout (matrix sections are 8-row aligned) --------
_R_WIH0 = 0                           # (F, 4H)  rows [0, 16)
_R_WHH0 = _R_WIH0 + N_FEATURES        # (H, 4H)  rows [16, 24)
_R_WIH1 = _R_WHH0 + HIDDEN            # (H, 4H)  rows [24, 32)
_R_WHH1 = _R_WIH1 + HIDDEN            # (H, 4H)  rows [32, 40)
_R_B0   = _R_WHH1 + HIDDEN            # row 40: fused layer-0 bias (1, 4H)
_R_B1   = _R_B0 + 1                   # row 41: fused layer-1 bias (1, 4H)
_R_WLIN = _R_B1 + 1                   # row 42: head weight row   (1, H)
_R_BLIN = _R_WLIN + 1                 # row 43: head bias         (1, 1)
_SLAB_ROWS = ((_R_BLIN + 1 + 7) // 8) * 8   # 48


# --- Pallas kernel: 2-layer LSTM + ReLU + Linear head, fully fused -----------
def lstm_net_kernel(x_ref, slab_ref, out_ref):
    T, F = x_ref.shape
    H, G = HIDDEN, GATES

    # One-shot weight loads (static slab slices, stay resident in vregs).
    wih0 = slab_ref[_R_WIH0:_R_WIH0 + F, 0:G]
    whh0 = slab_ref[_R_WHH0:_R_WHH0 + H, 0:G]
    wih1 = slab_ref[_R_WIH1:_R_WIH1 + H, 0:G]
    whh1 = slab_ref[_R_WHH1:_R_WHH1 + H, 0:G]
    b0   = slab_ref[_R_B0:_R_B0 + 1, 0:G]
    b1   = slab_ref[_R_B1:_R_B1 + 1, 0:G]
    wlin = slab_ref[_R_WLIN:_R_WLIN + 1, 0:H]
    blin = slab_ref[_R_BLIN:_R_BLIN + 1, 0:1]

    # Hoisted layer-0 input projection: one (T,F)@(F,4H) MXU matmul + bias.
    px0 = jnp.dot(x_ref[...], wih0, preferred_element_type=jnp.float32) + b0

    def cell(px_t, h, c, whh):
        # Only the recurrent matmul sits on the serial chain.
        gates = px_t + jnp.dot(h, whh, preferred_element_type=jnp.float32)
        # PyTorch gate order i,f,g,o.  The g columns of every weight/bias were
        # pre-scaled by 2 in the slab, so one sigmoid over all 4H lanes yields
        # sigmoid(i), sigmoid(f), sigmoid(2*g_pre), sigmoid(o); tanh(g_pre) is
        # recovered with a VPU mul/sub -> 2 EUP pushes per step total.
        s = jax.nn.sigmoid(gates)
        i = s[:, 0:H]
        f = s[:, H:2 * H]
        g = 2.0 * s[:, 2 * H:3 * H] - 1.0
        o = s[:, 3 * H:4 * H]
        c_new = f * c + i * g
        h_new = o * jnp.tanh(c_new)
        return h_new, c_new

    zeros = jnp.zeros((1, H), jnp.float32)
    h0, c0, h1, c1 = zeros, zeros, zeros, zeros
    out_row = jnp.zeros((1, T), jnp.float32)
    lane_ids = lax.broadcasted_iota(jnp.int32, (1, T), 1)

    # Wavefront over both layers, fully unrolled (T static): layer-1 step t
    # runs immediately after layer-0 step t, so the two recurrent chains
    # overlap and the critical path is ~T+1 cell latencies instead of 2T.
    for t in range(T):
        h0, c0 = cell(px0[t:t + 1, :], h0, c0, whh0)
        px1_t = jnp.dot(h0, wih1, preferred_element_type=jnp.float32) + b1
        h1, c1 = cell(px1_t, h1, c1, whh1)
        # F.relu on the LSTM output + deferred Linear head, accumulated
        # lane-dense (VPU multiply + lane reduce, off the serial chain).
        y_t = jnp.maximum(h1, 0.0)
        o_t = jnp.sum(y_t * wlin, axis=-1, keepdims=True)          # (1,1)
        out_row = jnp.where(lane_ids == t, o_t, out_row)

    out_ref[...] = out_row + blin                                   # (1,T)


# --- one-time parameter packing (all per-call glue lives here) ----------------
def prepare_params(params):
    """Transpose, fuse bih+bhh, bake the tanh(g)=2*sigmoid(2g)-1 scaling into
    the g columns, and pack everything into one lane-padded f32 slab."""
    (wih0, whh0, bih0, bhh0, wih1, whh1, bih1, bhh1, wlin, blin) = params
    H, F, G = HIDDEN, N_FEATURES, GATES
    gscale = np.ones((G,), np.float32)
    gscale[2 * H:3 * H] = 2.0
    slab = np.zeros((_SLAB_ROWS, LANES), np.float32)
    slab[_R_WIH0:_R_WIH0 + F, :G] = np.asarray(wih0, np.float32).T * gscale
    slab[_R_WHH0:_R_WHH0 + H, :G] = np.asarray(whh0, np.float32).T * gscale
    slab[_R_WIH1:_R_WIH1 + H, :G] = np.asarray(wih1, np.float32).T * gscale
    slab[_R_WHH1:_R_WHH1 + H, :G] = np.asarray(whh1, np.float32).T * gscale
    slab[_R_B0, :G] = (np.asarray(bih0, np.float32)
                       + np.asarray(bhh0, np.float32)) * gscale
    slab[_R_B1, :G] = (np.asarray(bih1, np.float32)
                       + np.asarray(bhh1, np.float32)) * gscale
    slab[_R_WLIN, :H] = np.asarray(wlin, np.float32).reshape(-1)
    slab[_R_BLIN, 0] = np.asarray(blin, np.float32).reshape(())
    return jnp.asarray(slab)


# --- wrapper ------------------------------------------------------------------
def net_forward(x, slab):
    """x: (1, T, F) float32, slab: prepacked params  ->  (T, 1) float32."""
    assert x.shape[0] == 1, "Net.forward's view(week_size, -1) implies batch==1"
    T = x.shape[1]
    vmem = pl.BlockSpec(memory_space=pltpu.MemorySpace.VMEM)
    out_row = pl.pallas_call(
        lstm_net_kernel,
        out_shape=jax.ShapeDtypeStruct((1, T), jnp.float32),   # lane-dense row
        in_specs=[vmem, vmem],
        out_specs=vmem,
    )(x[0], slab)
    return out_row.reshape(T, 1)


# --- pure-JAX reference (for correctness check) --------------------------------
def net_reference(x, params):
    (wih0, whh0, bih0, bhh0, wih1, whh1, bih1, bhh1, wlin, blin) = params
    H = HIDDEN
    x2d = x[0]

    def run_layer(seq, wih, whh, bih, bhh):
        def step(carry, xt):
            h, c = carry
            gates = xt @ wih.T + bih + h @ whh.T + bhh
            i = jax.nn.sigmoid(gates[0:H])
            f = jax.nn.sigmoid(gates[H:2 * H])
            g = jnp.tanh(gates[2 * H:3 * H])
            o = jax.nn.sigmoid(gates[3 * H:4 * H])
            c = f * c + i * g
            h = o * jnp.tanh(c)
            return (h, c), h
        _, hs = lax.scan(step, (jnp.zeros(H), jnp.zeros(H)), seq)
        return hs

    h0 = run_layer(x2d, wih0, whh0, bih0, bhh0)
    h1 = run_layer(h0, wih1, whh1, bih1, bhh1)
    y = jnp.maximum(h1, 0.0)
    return y @ wlin.T + blin


# --- deterministic parameter init (PyTorch-style uniform) ----------------------
def init_params(key):
    bound = 1.0 / jnp.sqrt(jnp.float32(HIDDEN))
    ks = jax.random.split(key, 10)
    u = lambda k, shape: jax.random.uniform(
        k, shape, jnp.float32, minval=-bound, maxval=bound)
    wih0 = u(ks[0], (4 * HIDDEN, N_FEATURES))
    whh0 = u(ks[1], (4 * HIDDEN, HIDDEN))
    bih0 = u(ks[2], (4 * HIDDEN,))
    bhh0 = u(ks[3], (4 * HIDDEN,))
    wih1 = u(ks[4], (4 * HIDDEN, HIDDEN))
    whh1 = u(ks[5], (4 * HIDDEN, HIDDEN))
    bih1 = u(ks[6], (4 * HIDDEN,))
    bhh1 = u(ks[7], (4 * HIDDEN,))
    wlin = u(ks[8], (1, HIDDEN))
    blin = u(ks[9], (1,))
    return (wih0, whh0, bih0, bhh0, wih1, whh1, bih1, bhh1, wlin, blin)


if __name__ == "__main__":
    key = jax.random.PRNGKey(0)
    pkey, xkey = jax.random.split(key)
    params = init_params(pkey)
    slab = prepare_params(params)                 # one-time param prep
    x = jax.random.normal(xkey, (1, SEQ, N_FEATURES), dtype=jnp.float32)

    out = net_forward(x, slab)
    jax.block_until_ready(out)

    ref = net_reference(x, params)
    assert out.shape == (SEQ, 1)
    assert jnp.allclose(out, ref, atol=5e-5, rtol=5e-5), (out, ref)
    print("KERNEL_OK")
</pallas_src>

<mosaic_0001>
module attributes {stable_mosaic.version = 11 : i64} {
  func.func @lstm_net_kernel(%arg0: memref<8x16xf32, #tpu.memory_space<vmem>>, %arg1: memref<48x128xf32, #tpu.memory_space<vmem>>, %arg2: memref<1x8xf32, #tpu.memory_space<vmem>>) attributes {dimension_semantics = [], scalar_prefetch = 0 : i64, scratch_operands = 0 : i64, tpu.core_type = #tpu.core_type<tc>} {
    %c0 = arith.constant 0 : index
    %c0_0 = arith.constant 0 : index
    %0 = vector.load %arg1[%c0, %c0_0] : memref<48x128xf32, #tpu.memory_space<vmem>>, vector<16x32xf32>
    %c16 = arith.constant 16 : index
    %c0_1 = arith.constant 0 : index
    %1 = vector.load %arg1[%c16, %c0_1] : memref<48x128xf32, #tpu.memory_space<vmem>>, vector<8x32xf32>
    %c24 = arith.constant 24 : index
    %c0_2 = arith.constant 0 : index
    %2 = vector.load %arg1[%c24, %c0_2] : memref<48x128xf32, #tpu.memory_space<vmem>>, vector<8x32xf32>
    %c32 = arith.constant 32 : index
    %c0_3 = arith.constant 0 : index
    %3 = vector.load %arg1[%c32, %c0_3] : memref<48x128xf32, #tpu.memory_space<vmem>>, vector<8x32xf32>
    %c40 = arith.constant 40 : index
    %c0_4 = arith.constant 0 : index
    %4 = vector.load %arg1[%c40, %c0_4] : memref<48x128xf32, #tpu.memory_space<vmem>>, vector<1x32xf32>
    %c41 = arith.constant 41 : index
    %c0_5 = arith.constant 0 : index
    %5 = vector.load %arg1[%c41, %c0_5] : memref<48x128xf32, #tpu.memory_space<vmem>>, vector<1x32xf32>
    %c42 = arith.constant 42 : index
    %c0_6 = arith.constant 0 : index
    %6 = vector.load %arg1[%c42, %c0_6] : memref<48x128xf32, #tpu.memory_space<vmem>>, vector<1x8xf32>
    %c43 = arith.constant 43 : index
    %c0_7 = arith.constant 0 : index
    %7 = vector.load %arg1[%c43, %c0_7] : memref<48x128xf32, #tpu.memory_space<vmem>>, vector<1x1xf32>
    %c0_8 = arith.constant 0 : index
    %c0_9 = arith.constant 0 : index
    %8 = vector.load %arg0[%c0_8, %c0_9] : memref<8x16xf32, #tpu.memory_space<vmem>>, vector<8x16xf32>
    %cst = arith.constant dense<0.000000e+00> : vector<8x32xf32>
    %9 = tpu.matmul %8, %0, %cst {dimension_numbers = #tpu.dot_dimension_numbers<[1], [0], [0], [1], [0, 0, 1, 1], [], []>} : vector<8x16xf32>, vector<16x32xf32>, vector<8x32xf32> -> vector<8x32xf32>
    %10 = vector.broadcast %4 : vector<1x32xf32> to vector<8x32xf32>
    %11 = arith.addf %9, %10 : vector<8x32xf32>
    %cst_10 = arith.constant 0.000000e+00 : f32
    %12 = vector.broadcast %cst_10 : f32 to vector<1x8xf32>
    %cst_11 = arith.constant 0.000000e+00 : f32
    %13 = vector.broadcast %cst_11 : f32 to vector<1x8xf32>
    %14 = tpu.iota {dimensions = array<i32: 1>} : vector<1x8xi32>
    %15 = vector.extract_strided_slice %11 {offsets = [0, 0], sizes = [1, 32], strides = [1, 1]} : vector<8x32xf32> to vector<1x32xf32>
    %cst_12 = arith.constant dense<0.000000e+00> : vector<1x32xf32>
    %16 = tpu.matmul %12, %1, %cst_12 {dimension_numbers = #tpu.dot_dimension_numbers<[1], [0], [0], [1], [0, 0, 1, 1], [], []>} : vector<1x8xf32>, vector<8x32xf32>, vector<1x32xf32> -> vector<1x32xf32>
    %17 = arith.addf %15, %16 : vector<1x32xf32>
    %18 = arith.negf %17 : vector<1x32xf32>
    %19 = math.exp %18 : vector<1x32xf32>
    %cst_13 = arith.constant 1.000000e+00 : f32
    %20 = vector.broadcast %cst_13 : f32 to vector<1x32xf32>
    %21 = arith.addf %20, %19 : vector<1x32xf32>
    %22 = arith.divf %20, %21 : vector<1x32xf32>
    %23 = vector.extract_strided_slice %22 {offsets = [0, 0], sizes = [1, 8], strides = [1, 1]} : vector<1x32xf32> to vector<1x8xf32>
    %24 = vector.extract_strided_slice %22 {offsets = [0, 8], sizes = [1, 8], strides = [1, 1]} : vector<1x32xf32> to vector<1x8xf32>
    %25 = vector.extract_strided_slice %22 {offsets = [0, 16], sizes = [1, 8], strides = [1, 1]} : vector<1x32xf32> to vector<1x8xf32>
    %cst_14 = arith.constant 2.000000e+00 : f32
    %26 = vector.broadcast %cst_14 : f32 to vector<1x8xf32>
    %27 = arith.mulf %26, %25 : vector<1x8xf32>
    %cst_15 = arith.constant 1.000000e+00 : f32
    %28 = vector.broadcast %cst_15 : f32 to vector<1x8xf32>
    %29 = arith.subf %27, %28 : vector<1x8xf32>
    %30 = vector.extract_strided_slice %22 {offsets = [0, 24], sizes = [1, 8], strides = [1, 1]} : vector<1x32xf32> to vector<1x8xf32>
    %31 = arith.mulf %24, %12 : vector<1x8xf32>
    %32 = arith.mulf %23, %29 : vector<1x8xf32>
    %33 = arith.addf %31, %32 : vector<1x8xf32>
    %34 = math.tanh %33 : vector<1x8xf32>
    %35 = arith.mulf %30, %34 : vector<1x8xf32>
    %cst_16 = arith.constant dense<0.000000e+00> : vector<1x32xf32>
    %36 = tpu.matmul %35, %2, %cst_16 {dimension_numbers = #tpu.dot_dimension_numbers<[1], [0], [0], [1], [0, 0, 1, 1], [], []>} : vector<1x8xf32>, vector<8x32xf32>, vector<1x32xf32> -> vector<1x32xf32>
    %37 = arith.addf %36, %5 : vector<1x32xf32>
    %cst_17 = arith.constant dense<0.000000e+00> : vector<1x32xf32>
    %38 = tpu.matmul %12, %3, %cst_17 {dimension_numbers = #tpu.dot_dimension_numbers<[1], [0], [0], [1], [0, 0, 1, 1], [], []>} : vector<1x8xf32>, vector<8x32xf32>, vector<1x32xf32> -> vector<1x32xf32>
    %39 = arith.addf %37, %38 : vector<1x32xf32>
    %40 = arith.negf %39 : vector<1x32xf32>
    %41 = math.exp %40 : vector<1x32xf32>
    %cst_18 = arith.constant 1.000000e+00 : f32
    %42 = vector.broadcast %cst_18 : f32 to vector<1x32xf32>
    %43 = arith.addf %42, %41 : vector<1x32xf32>
    %44 = arith.divf %42, %43 : vector<1x32xf32>
    %45 = vector.extract_strided_slice %44 {offsets = [0, 0], sizes = [1, 8], strides = [1, 1]} : vector<1x32xf32> to vector<1x8xf32>
    %46 = vector.extract_strided_slice %44 {offsets = [0, 8], sizes = [1, 8], strides = [1, 1]} : vector<1x32xf32> to vector<1x8xf32>
    %47 = vector.extract_strided_slice %44 {offsets = [0, 16], sizes = [1, 8], strides = [1, 1]} : vector<1x32xf32> to vector<1x8xf32>
    %cst_19 = arith.constant 2.000000e+00 : f32
    %48 = vector.broadcast %cst_19 : f32 to vector<1x8xf32>
    %49 = arith.mulf %48, %47 : vector<1x8xf32>
    %cst_20 = arith.constant 1.000000e+00 : f32
    %50 = vector.broadcast %cst_20 : f32 to vector<1x8xf32>
    %51 = arith.subf %49, %50 : vector<1x8xf32>
    %52 = vector.extract_strided_slice %44 {offsets = [0, 24], sizes = [1, 8], strides = [1, 1]} : vector<1x32xf32> to vector<1x8xf32>
    %53 = arith.mulf %46, %12 : vector<1x8xf32>
    %54 = arith.mulf %45, %51 : vector<1x8xf32>
    %55 = arith.addf %53, %54 : vector<1x8xf32>
    %56 = math.tanh %55 : vector<1x8xf32>
    %57 = arith.mulf %52, %56 : vector<1x8xf32>
    %cst_21 = arith.constant 0.000000e+00 : f32
    %58 = vector.broadcast %cst_21 : f32 to vector<1x8xf32>
    %59 = arith.maximumf %57, %58 : vector<1x8xf32>
    %60 = arith.mulf %59, %6 : vector<1x8xf32>
    %cst_22 = arith.constant dense<0.000000e+00> : vector<1xf32>
    %61 = vector.multi_reduction <add>, %60, %cst_22 [1] : vector<1x8xf32> to vector<1xf32>
    %62 = vector.shape_cast %61 : vector<1xf32> to vector<1x1xf32>
    %c0_i32 = arith.constant 0 : i32
    %63 = vector.broadcast %c0_i32 : i32 to vector<1x8xi32>
    %64 = arith.cmpi eq, %14, %63 : vector<1x8xi32>
    %65 = vector.shape_cast %62 : vector<1x1xf32> to vector<1x1xf32>
    %66 = vector.broadcast %65 : vector<1x1xf32> to vector<1x8xf32>
    %67 = arith.select %64, %66, %13 : vector<1x8xi1>, vector<1x8xf32>
    %68 = vector.extract_strided_slice %11 {offsets = [1, 0], sizes = [1, 32], strides = [1, 1]} : vector<8x32xf32> to vector<1x32xf32>
    %cst_23 = arith.constant dense<0.000000e+00> : vector<1x32xf32>
    %69 = tpu.matmul %35, %1, %cst_23 {dimension_numbers = #tpu.dot_dimension_numbers<[1], [0], [0], [1], [0, 0, 1, 1], [], []>} : vector<1x8xf32>, vector<8x32xf32>, vector<1x32xf32> -> vector<1x32xf32>
    %70 = arith.addf %68, %69 : vector<1x32xf32>
    %71 = arith.negf %70 : vector<1x32xf32>
    %72 = math.exp %71 : vector<1x32xf32>
    %cst_24 = arith.constant 1.000000e+00 : f32
    %73 = vector.broadcast %cst_24 : f32 to vector<1x32xf32>
    %74 = arith.addf %73, %72 : vector<1x32xf32>
    %75 = arith.divf %73, %74 : vector<1x32xf32>
    %76 = vector.extract_strided_slice %75 {offsets = [0, 0], sizes = [1, 8], strides = [1, 1]} : vector<1x32xf32> to vector<1x8xf32>
    %77 = vector.extract_strided_slice %75 {offsets = [0, 8], sizes = [1, 8], strides = [1, 1]} : vector<1x32xf32> to vector<1x8xf32>
    %78 = vector.extract_strided_slice %75 {offsets = [0, 16], sizes = [1, 8], strides = [1, 1]} : vector<1x32xf32> to vector<1x8xf32>
    %cst_25 = arith.constant 2.000000e+00 : f32
    %79 = vector.broadcast %cst_25 : f32 to vector<1x8xf32>
    %80 = arith.mulf %79, %78 : vector<1x8xf32>
    %cst_26 = arith.constant 1.000000e+00 : f32
    %81 = vector.broadcast %cst_26 : f32 to vector<1x8xf32>
    %82 = arith.subf %80, %81 : vector<1x8xf32>
    %83 = vector.extract_strided_slice %75 {offsets = [0, 24], sizes = [1, 8], strides = [1, 1]} : vector<1x32xf32> to vector<1x8xf32>
    %84 = arith.mulf %77, %33 : vector<1x8xf32>
    %85 = arith.mulf %76, %82 : vector<1x8xf32>
    %86 = arith.addf %84, %85 : vector<1x8xf32>
    %87 = math.tanh %86 : vector<1x8xf32>
    %88 = arith.mulf %83, %87 : vector<1x8xf32>
    %cst_27 = arith.constant dense<0.000000e+00> : vector<1x32xf32>
    %89 = tpu.matmul %88, %2, %cst_27 {dimension_numbers = #tpu.dot_dimension_numbers<[1], [0], [0], [1], [0, 0, 1, 1], [], []>} : vector<1x8xf32>, vector<8x32xf32>, vector<1x32xf32> -> vector<1x32xf32>
    %90 = arith.addf %89, %5 : vector<1x32xf32>
    %cst_28 = arith.constant dense<0.000000e+00> : vector<1x32xf32>
    %91 = tpu.matmul %57, %3, %cst_28 {dimension_numbers = #tpu.dot_dimension_numbers<[1], [0], [0], [1], [0, 0, 1, 1], [], []>} : vector<1x8xf32>, vector<8x32xf32>, vector<1x32xf32> -> vector<1x32xf32>
    %92 = arith.addf %90, %91 : vector<1x32xf32>
    %93 = arith.negf %92 : vector<1x32xf32>
    %94 = math.exp %93 : vector<1x32xf32>
    %cst_29 = arith.constant 1.000000e+00 : f32
    %95 = vector.broadcast %cst_29 : f32 to vector<1x32xf32>
    %96 = arith.addf %95, %94 : vector<1x32xf32>
    %97 = arith.divf %95, %96 : vector<1x32xf32>
    %98 = vector.extract_strided_slice %97 {offsets = [0, 0], sizes = [1, 8], strides = [1, 1]} : vector<1x32xf32> to vector<1x8xf32>
    %99 = vector.extract_strided_slice %97 {offsets = [0, 8], sizes = [1, 8], strides = [1, 1]} : vector<1x32xf32> to vector<1x8xf32>
    %100 = vector.extract_strided_slice %97 {offsets = [0, 16], sizes = [1, 8], strides = [1, 1]} : vector<1x32xf32> to vector<1x8xf32>
    %cst_30 = arith.constant 2.000000e+00 : f32
    %101 = vector.broadcast %cst_30 : f32 to vector<1x8xf32>
    %102 = arith.mulf %101, %100 : vector<1x8xf32>
    %cst_31 = arith.constant 1.000000e+00 : f32
    %103 = vector.broadcast %cst_31 : f32 to vector<1x8xf32>
    %104 = arith.subf %102, %103 : vector<1x8xf32>
    %105 = vector.extract_strided_slice %97 {offsets = [0, 24], sizes = [1, 8], strides = [1, 1]} : vector<1x32xf32> to vector<1x8xf32>
    %106 = arith.mulf %99, %55 : vector<1x8xf32>
    %107 = arith.mulf %98, %104 : vector<1x8xf32>
    %108 = arith.addf %106, %107 : vector<1x8xf32>
    %109 = math.tanh %108 : vector<1x8xf32>
    %110 = arith.mulf %105, %109 : vector<1x8xf32>
    %cst_32 = arith.constant 0.000000e+00 : f32
    %111 = vector.broadcast %cst_32 : f32 to vector<1x8xf32>
    %112 = arith.maximumf %110, %111 : vector<1x8xf32>
    %113 = arith.mulf %112, %6 : vector<1x8xf32>
    %cst_33 = arith.constant dense<0.000000e+00> : vector<1xf32>
    %114 = vector.multi_reduction <add>, %113, %cst_33 [1] : vector<1x8xf32> to vector<1xf32>
    %115 = vector.shape_cast %114 : vector<1xf32> to vector<1x1xf32>
    %c1_i32 = arith.constant 1 : i32
    %116 = vector.broadcast %c1_i32 : i32 to vector<1x8xi32>
    %117 = arith.cmpi eq, %14, %116 : vector<1x8xi32>
    %118 = vector.shape_cast %115 : vector<1x1xf32> to vector<1x1xf32>
    %119 = vector.broadcast %118 : vector<1x1xf32> to vector<1x8xf32>
    %120 = arith.select %117, %119, %67 : vector<1x8xi1>, vector<1x8xf32>
    %121 = vector.extract_strided_slice %11 {offsets = [2, 0], sizes = [1, 32], strides = [1, 1]} : vector<8x32xf32> to vector<1x32xf32>
    %cst_34 = arith.constant dense<0.000000e+00> : vector<1x32xf32>
    %122 = tpu.matmul %88, %1, %cst_34 {dimension_numbers = #tpu.dot_dimension_numbers<[1], [0], [0], [1], [0, 0, 1, 1], [], []>} : vector<1x8xf32>, vector<8x32xf32>, vector<1x32xf32> -> vector<1x32xf32>
    %123 = arith.addf %121, %122 : vector<1x32xf32>
    %124 = arith.negf %123 : vector<1x32xf32>
    %125 = math.exp %124 : vector<1x32xf32>
    %cst_35 = arith.constant 1.000000e+00 : f32
    %126 = vector.broadcast %cst_35 : f32 to vector<1x32xf32>
    %127 = arith.addf %126, %125 : vector<1x32xf32>
    %128 = arith.divf %126, %127 : vector<1x32xf32>
    %129 = vector.extract_strided_slice %128 {offsets = [0, 0], sizes = [1, 8], strides = [1, 1]} : vector<1x32xf32> to vector<1x8xf32>
    %130 = vector.extract_strided_slice %128 {offsets = [0, 8], sizes = [1, 8], strides = [1, 1]} : vector<1x32xf32> to vector<1x8xf32>
    %131 = vector.extract_strided_slice %128 {offsets = [0, 16], sizes = [1, 8], strides = [1, 1]} : vector<1x32xf32> to vector<1x8xf32>
    %cst_36 = arith.constant 2.000000e+00 : f32
    %132 = vector.broadcast %cst_36 : f32 to vector<1x8xf32>
    %133 = arith.mulf %132, %131 : vector<1x8xf32>
    %cst_37 = arith.constant 1.000000e+00 : f32
    %134 = vector.broadcast %cst_37 : f32 to vector<1x8xf32>
    %135 = arith.subf %133, %134 : vector<1x8xf32>
    %136 = vector.extract_strided_slice %128 {offsets = [0, 24], sizes = [1, 8], strides = [1, 1]} : vector<1x32xf32> to vector<1x8xf32>
    %137 = arith.mulf %130, %86 : vector<1x8xf32>
    %138 = arith.mulf %129, %135 : vector<1x8xf32>
    %139 = arith.addf %137, %138 : vector<1x8xf32>
    %140 = math.tanh %139 : vector<1x8xf32>
    %141 = arith.mulf %136, %140 : vector<1x8xf32>
    %cst_38 = arith.constant dense<0.000000e+00> : vector<1x32xf32>
    %142 = tpu.matmul %141, %2, %cst_38 {dimension_numbers = #tpu.dot_dimension_numbers<[1], [0], [0], [1], [0, 0, 1, 1], [], []>} : vector<1x8xf32>, vector<8x32xf32>, vector<1x32xf32> -> vector<1x32xf32>
    %143 = arith.addf %142, %5 : vector<1x32xf32>
    %cst_39 = arith.constant dense<0.000000e+00> : vector<1x32xf32>
    %144 = tpu.matmul %110, %3, %cst_39 {dimension_numbers = #tpu.dot_dimension_numbers<[1], [0], [0], [1], [0, 0, 1, 1], [], []>} : vector<1x8xf32>, vector<8x32xf32>, vector<1x32xf32> -> vector<1x32xf32>
    %145 = arith.addf %143, %144 : vector<1x32xf32>
    %146 = arith.negf %145 : vector<1x32xf32>
    %147 = math.exp %146 : vector<1x32xf32>
    %cst_40 = arith.constant 1.000000e+00 : f32
    %148 = vector.broadcast %cst_40 : f32 to vector<1x32xf32>
    %149 = arith.addf %148, %147 : vector<1x32xf32>
    %150 = arith.divf %148, %149 : vector<1x32xf32>
    %151 = vector.extract_strided_slice %150 {offsets = [0, 0], sizes = [1, 8], strides = [1, 1]} : vector<1x32xf32> to vector<1x8xf32>
    %152 = vector.extract_strided_slice %150 {offsets = [0, 8], sizes = [1, 8], strides = [1, 1]} : vector<1x32xf32> to vector<1x8xf32>
    %153 = vector.extract_strided_slice %150 {offsets = [0, 16], sizes = [1, 8], strides = [1, 1]} : vector<1x32xf32> to vector<1x8xf32>
    %cst_41 = arith.constant 2.000000e+00 : f32
    %154 = vector.broadcast %cst_41 : f32 to vector<1x8xf32>
    %155 = arith.mulf %154, %153 : vector<1x8xf32>
    %cst_42 = arith.constant 1.000000e+00 : f32
    %156 = vector.broadcast %cst_42 : f32 to vector<1x8xf32>
    %157 = arith.subf %155, %156 : vector<1x8xf32>
    %158 = vector.extract_strided_slice %150 {offsets = [0, 24], sizes = [1, 8], strides = [1, 1]} : vector<1x32xf32> to vector<1x8xf32>
    %159 = arith.mulf %152, %108 : vector<1x8xf32>
    %160 = arith.mulf %151, %157 : vector<1x8xf32>
    %161 = arith.addf %159, %160 : vector<1x8xf32>
    %162 = math.tanh %161 : vector<1x8xf32>
    %163 = arith.mulf %158, %162 : vector<1x8xf32>
    %cst_43 = arith.constant 0.000000e+00 : f32
    %164 = vector.broadcast %cst_43 : f32 to vector<1x8xf32>
    %165 = arith.maximumf %163, %164 : vector<1x8xf32>
    %166 = arith.mulf %165, %6 : vector<1x8xf32>
    %cst_44 = arith.constant dense<0.000000e+00> : vector<1xf32>
    %167 = vector.multi_reduction <add>, %166, %cst_44 [1] : vector<1x8xf32> to vector<1xf32>
    %168 = vector.shape_cast %167 : vector<1xf32> to vector<1x1xf32>
    %c2_i32 = arith.constant 2 : i32
    %169 = vector.broadcast %c2_i32 : i32 to vector<1x8xi32>
    %170 = arith.cmpi eq, %14, %169 : vector<1x8xi32>
    %171 = vector.shape_cast %168 : vector<1x1xf32> to vector<1x1xf32>
    %172 = vector.broadcast %171 : vector<1x1xf32> to vector<1x8xf32>
    %173 = arith.select %170, %172, %120 : vector<1x8xi1>, vector<1x8xf32>
    %174 = vector.extract_strided_slice %11 {offsets = [3, 0], sizes = [1, 32], strides = [1, 1]} : vector<8x32xf32> to vector<1x32xf32>
    %cst_45 = arith.constant dense<0.000000e+00> : vector<1x32xf32>
    %175 = tpu.matmul %141, %1, %cst_45 {dimension_numbers = #tpu.dot_dimension_numbers<[1], [0], [0], [1], [0, 0, 1, 1], [], []>} : vector<1x8xf32>, vector<8x32xf32>, vector<1x32xf32> -> vector<1x32xf32>
    %176 = arith.addf %174, %175 : vector<1x32xf32>
    %177 = arith.negf %176 : vector<1x32xf32>
    %178 = math.exp %177 : vector<1x32xf32>
    %cst_46 = arith.constant 1.000000e+00 : f32
    %179 = vector.broadcast %cst_46 : f32 to vector<1x32xf32>
    %180 = arith.addf %179, %178 : vector<1x32xf32>
    %181 = arith.divf %179, %180 : vector<1x32xf32>
    %182 = vector.extract_strided_slice %181 {offsets = [0, 0], sizes = [1, 8], strides = [1, 1]} : vector<1x32xf32> to vector<1x8xf32>
    %183 = vector.extract_strided_slice %181 {offsets = [0, 8], sizes = [1, 8], strides = [1, 1]} : vector<1x32xf32> to vector<1x8xf32>
    %184 = vector.extract_strided_slice %181 {offsets = [0, 16], sizes = [1, 8], strides = [1, 1]} : vector<1x32xf32> to vector<1x8xf32>
    %cst_47 = arith.constant 2.000000e+00 : f32
    %185 = vector.broadcast %cst_47 : f32 to vector<1x8xf32>
    %186 = arith.mulf %185, %184 : vector<1x8xf32>
    %cst_48 = arith.constant 1.000000e+00 : f32
    %187 = vector.broadcast %cst_48 : f32 to vector<1x8xf32>
    %188 = arith.subf %186, %187 : vector<1x8xf32>
    %189 = vector.extract_strided_slice %181 {offsets = [0, 24], sizes = [1, 8], strides = [1, 1]} : vector<1x32xf32> to vector<1x8xf32>
    %190 = arith.mulf %183, %139 : vector<1x8xf32>
    %191 = arith.mulf %182, %188 : vector<1x8xf32>
    %192 = arith.addf %190, %191 : vector<1x8xf32>
    %193 = math.tanh %192 : vector<1x8xf32>
    %194 = arith.mulf %189, %193 : vector<1x8xf32>
    %cst_49 = arith.constant dense<0.000000e+00> : vector<1x32xf32>
    %195 = tpu.matmul %194, %2, %cst_49 {dimension_numbers = #tpu.dot_dimension_numbers<[1], [0], [0], [1], [0, 0, 1, 1], [], []>} : vector<1x8xf32>, vector<8x32xf32>, vector<1x32xf32> -> vector<1x32xf32>
    %196 = arith.addf %195, %5 : vector<1x32xf32>
    %cst_50 = arith.constant dense<0.000000e+00> : vector<1x32xf32>
    %197 = tpu.matmul %163, %3, %cst_50 {dimension_numbers = #tpu.dot_dimension_numbers<[1], [0], [0], [1], [0, 0, 1, 1], [], []>} : vector<1x8xf32>, vector<8x32xf32>, vector<1x32xf32> -> vector<1x32xf32>
    %198 = arith.addf %196, %197 : vector<1x32xf32>
    %199 = arith.negf %198 : vector<1x32xf32>
    %200 = math.exp %199 : vector<1x32xf32>
    %cst_51 = arith.constant 1.000000e+00 : f32
    %201 = vector.broadcast %cst_51 : f32 to vector<1x32xf32>
    %202 = arith.addf %201, %200 : vector<1x32xf32>
    %203 = arith.divf %201, %202 : vector<1x32xf32>
    %204 = vector.extract_strided_slice %203 {offsets = [0, 0], sizes = [1, 8], strides = [1, 1]} : vector<1x32xf32> to vector<1x8xf32>
    %205 = vector.extract_strided_slice %203 {offsets = [0, 8], sizes = [1, 8], strides = [1, 1]} : vector<1x32xf32> to vector<1x8xf32>
    %206 = vector.extract_strided_slice %203 {offsets = [0, 16], sizes = [1, 8], strides = [1, 1]} : vector<1x32xf32> to vector<1x8xf32>
    %cst_52 = arith.constant 2.000000e+00 : f32
    %207 = vector.broadcast %cst_52 : f32 to vector<1x8xf32>
    %208 = arith.mulf %207, %206 : vector<1x8xf32>
    %cst_53 = arith.constant 1.000000e+00 : f32
    %209 = vector.broadcast %cst_53 : f32 to vector<1x8xf32>
    %210 = arith.subf %208, %209 : vector<1x8xf32>
    %211 = vector.extract_strided_slice %203 {offsets = [0, 24], sizes = [1, 8], strides = [1, 1]} : vector<1x32xf32> to vector<1x8xf32>
    %212 = arith.mulf %205, %161 : vector<1x8xf32>
    %213 = arith.mulf %204, %210 : vector<1x8xf32>
    %214 = arith.addf %212, %213 : vector<1x8xf32>
    %215 = math.tanh %214 : vector<1x8xf32>
    %216 = arith.mulf %211, %215 : vector<1x8xf32>
    %cst_54 = arith.constant 0.000000e+00 : f32
    %217 = vector.broadcast %cst_54 : f32 to vector<1x8xf32>
    %218 = arith.maximumf %216, %217 : vector<1x8xf32>
    %219 = arith.mulf %218, %6 : vector<1x8xf32>
    %cst_55 = arith.constant dense<0.000000e+00> : vector<1xf32>
    %220 = vector.multi_reduction <add>, %219, %cst_55 [1] : vector<1x8xf32> to vector<1xf32>
    %221 = vector.shape_cast %220 : vector<1xf32> to vector<1x1xf32>
    %c3_i32 = arith.constant 3 : i32
    %222 = vector.broadcast %c3_i32 : i32 to vector<1x8xi32>
    %223 = arith.cmpi eq, %14, %222 : vector<1x8xi32>
    %224 = vector.shape_cast %221 : vector<1x1xf32> to vector<1x1xf32>
    %225 = vector.broadcast %224 : vector<1x1xf32> to vector<1x8xf32>
    %226 = arith.select %223, %225, %173 : vector<1x8xi1>, vector<1x8xf32>
    %227 = vector.extract_strided_slice %11 {offsets = [4, 0], sizes = [1, 32], strides = [1, 1]} : vector<8x32xf32> to vector<1x32xf32>
    %cst_56 = arith.constant dense<0.000000e+00> : vector<1x32xf32>
    %228 = tpu.matmul %194, %1, %cst_56 {dimension_numbers = #tpu.dot_dimension_numbers<[1], [0], [0], [1], [0, 0, 1, 1], [], []>} : vector<1x8xf32>, vector<8x32xf32>, vector<1x32xf32> -> vector<1x32xf32>
    %229 = arith.addf %227, %228 : vector<1x32xf32>
    %230 = arith.negf %229 : vector<1x32xf32>
    %231 = math.exp %230 : vector<1x32xf32>
    %cst_57 = arith.constant 1.000000e+00 : f32
    %232 = vector.broadcast %cst_57 : f32 to vector<1x32xf32>
    %233 = arith.addf %232, %231 : vector<1x32xf32>
    %234 = arith.divf %232, %233 : vector<1x32xf32>
    %235 = vector.extract_strided_slice %234 {offsets = [0, 0], sizes = [1, 8], strides = [1, 1]} : vector<1x32xf32> to vector<1x8xf32>
    %236 = vector.extract_strided_slice %234 {offsets = [0, 8], sizes = [1, 8], strides = [1, 1]} : vector<1x32xf32> to vector<1x8xf32>
    %237 = vector.extract_strided_slice %234 {offsets = [0, 16], sizes = [1, 8], strides = [1, 1]} : vector<1x32xf32> to vector<1x8xf32>
    %cst_58 = arith.constant 2.000000e+00 : f32
    %238 = vector.broadcast %cst_58 : f32 to vector<1x8xf32>
    %239 = arith.mulf %238, %237 : vector<1x8xf32>
    %cst_59 = arith.constant 1.000000e+00 : f32
    %240 = vector.broadcast %cst_59 : f32 to vector<1x8xf32>
    %241 = arith.subf %239, %240 : vector<1x8xf32>
    %242 = vector.extract_strided_slice %234 {offsets = [0, 24], sizes = [1, 8], strides = [1, 1]} : vector<1x32xf32> to vector<1x8xf32>
    %243 = arith.mulf %236, %192 : vector<1x8xf32>
    %244 = arith.mulf %235, %241 : vector<1x8xf32>
    %245 = arith.addf %243, %244 : vector<1x8xf32>
    %246 = math.tanh %245 : vector<1x8xf32>
    %247 = arith.mulf %242, %246 : vector<1x8xf32>
    %cst_60 = arith.constant dense<0.000000e+00> : vector<1x32xf32>
    %248 = tpu.matmul %247, %2, %cst_60 {dimension_numbers = #tpu.dot_dimension_numbers<[1], [0], [0], [1], [0, 0, 1, 1], [], []>} : vector<1x8xf32>, vector<8x32xf32>, vector<1x32xf32> -> vector<1x32xf32>
    %249 = arith.addf %248, %5 : vector<1x32xf32>
    %cst_61 = arith.constant dense<0.000000e+00> : vector<1x32xf32>
    %250 = tpu.matmul %216, %3, %cst_61 {dimension_numbers = #tpu.dot_dimension_numbers<[1], [0], [0], [1], [0, 0, 1, 1], [], []>} : vector<1x8xf32>, vector<8x32xf32>, vector<1x32xf32> -> vector<1x32xf32>
    %251 = arith.addf %249, %250 : vector<1x32xf32>
    %252 = arith.negf %251 : vector<1x32xf32>
    %253 = math.exp %252 : vector<1x32xf32>
    %cst_62 = arith.constant 1.000000e+00 : f32
    %254 = vector.broadcast %cst_62 : f32 to vector<1x32xf32>
    %255 = arith.addf %254, %253 : vector<1x32xf32>
    %256 = arith.divf %254, %255 : vector<1x32xf32>
    %257 = vector.extract_strided_slice %256 {offsets = [0, 0], sizes = [1, 8], strides = [1, 1]} : vector<1x32xf32> to vector<1x8xf32>
    %258 = vector.extract_strided_slice %256 {offsets = [0, 8], sizes = [1, 8], strides = [1, 1]} : vector<1x32xf32> to vector<1x8xf32>
    %259 = vector.extract_strided_slice %256 {offsets = [0, 16], sizes = [1, 8], strides = [1, 1]} : vector<1x32xf32> to vector<1x8xf32>
    %cst_63 = arith.constant 2.000000e+00 : f32
    %260 = vector.broadcast %cst_63 : f32 to vector<1x8xf32>
    %261 = arith.mulf %260, %259 : vector<1x8xf32>
    %cst_64 = arith.constant 1.000000e+00 : f32
    %262 = vector.broadcast %cst_64 : f32 to vector<1x8xf32>
    %263 = arith.subf %261, %262 : vector<1x8xf32>
    %264 = vector.extract_strided_slice %256 {offsets = [0, 24], sizes = [1, 8], strides = [1, 1]} : vector<1x32xf32> to vector<1x8xf32>
    %265 = arith.mulf %258, %214 : vector<1x8xf32>
    %266 = arith.mulf %257, %263 : vector<1x8xf32>
    %267 = arith.addf %265, %266 : vector<1x8xf32>
    %268 = math.tanh %267 : vector<1x8xf32>
    %269 = arith.mulf %264, %268 : vector<1x8xf32>
    %cst_65 = arith.constant 0.000000e+00 : f32
    %270 = vector.broadcast %cst_65 : f32 to vector<1x8xf32>
    %271 = arith.maximumf %269, %270 : vector<1x8xf32>
    %272 = arith.mulf %271, %6 : vector<1x8xf32>
    %cst_66 = arith.constant dense<0.000000e+00> : vector<1xf32>
    %273 = vector.multi_reduction <add>, %272, %cst_66 [1] : vector<1x8xf32> to vector<1xf32>
    %274 = vector.shape_cast %273 : vector<1xf32> to vector<1x1xf32>
    %c4_i32 = arith.constant 4 : i32
    %275 = vector.broadcast %c4_i32 : i32 to vector<1x8xi32>
    %276 = arith.cmpi eq, %14, %275 : vector<1x8xi32>
    %277 = vector.shape_cast %274 : vector<1x1xf32> to vector<1x1xf32>
    %278 = vector.broadcast %277 : vector<1x1xf32> to vector<1x8xf32>
    %279 = arith.select %276, %278, %226 : vector<1x8xi1>, vector<1x8xf32>
    %280 = vector.extract_strided_slice %11 {offsets = [5, 0], sizes = [1, 32], strides = [1, 1]} : vector<8x32xf32> to vector<1x32xf32>
    %cst_67 = arith.constant dense<0.000000e+00> : vector<1x32xf32>
    %281 = tpu.matmul %247, %1, %cst_67 {dimension_numbers = #tpu.dot_dimension_numbers<[1], [0], [0], [1], [0, 0, 1, 1], [], []>} : vector<1x8xf32>, vector<8x32xf32>, vector<1x32xf32> -> vector<1x32xf32>
    %282 = arith.addf %280, %281 : vector<1x32xf32>
    %283 = arith.negf %282 : vector<1x32xf32>
    %284 = math.exp %283 : vector<1x32xf32>
    %cst_68 = arith.constant 1.000000e+00 : f32
    %285 = vector.broadcast %cst_68 : f32 to vector<1x32xf32>
    %286 = arith.addf %285, %284 : vector<1x32xf32>
    %287 = arith.divf %285, %286 : vector<1x32xf32>
    %288 = vector.extract_strided_slice %287 {offsets = [0, 0], sizes = [1, 8], strides = [1, 1]} : vector<1x32xf32> to vector<1x8xf32>
    %289 = vector.extract_strided_slice %287 {offsets = [0, 8], sizes = [1, 8], strides = [1, 1]} : vector<1x32xf32> to vector<1x8xf32>
    %290 = vector.extract_strided_slice %287 {offsets = [0, 16], sizes = [1, 8], strides = [1, 1]} : vector<1x32xf32> to vector<1x8xf32>
    %cst_69 = arith.constant 2.000000e+00 : f32
    %291 = vector.broadcast %cst_69 : f32 to vector<1x8xf32>
    %292 = arith.mulf %291, %290 : vector<1x8xf32>
    %cst_70 = arith.constant 1.000000e+00 : f32
    %293 = vector.broadcast %cst_70 : f32 to vector<1x8xf32>
    %294 = arith.subf %292, %293 : vector<1x8xf32>
    %295 = vector.extract_strided_slice %287 {offsets = [0, 24], sizes = [1, 8], strides = [1, 1]} : vector<1x32xf32> to vector<1x8xf32>
    %296 = arith.mulf %289, %245 : vector<1x8xf32>
    %297 = arith.mulf %288, %294 : vector<1x8xf32>
    %298 = arith.addf %296, %297 : vector<1x8xf32>
    %299 = math.tanh %298 : vector<1x8xf32>
    %300 = arith.mulf %295, %299 : vector<1x8xf32>
    %cst_71 = arith.constant dense<0.000000e+00> : vector<1x32xf32>
    %301 = tpu.matmul %300, %2, %cst_71 {dimension_numbers = #tpu.dot_dimension_numbers<[1], [0], [0], [1], [0, 0, 1, 1], [], []>} : vector<1x8xf32>, vector<8x32xf32>, vector<1x32xf32> -> vector<1x32xf32>
    %302 = arith.addf %301, %5 : vector<1x32xf32>
    %cst_72 = arith.constant dense<0.000000e+00> : vector<1x32xf32>
    %303 = tpu.matmul %269, %3, %cst_72 {dimension_numbers = #tpu.dot_dimension_numbers<[1], [0], [0], [1], [0, 0, 1, 1], [], []>} : vector<1x8xf32>, vector<8x32xf32>, vector<1x32xf32> -> vector<1x32xf32>
    %304 = arith.addf %302, %303 : vector<1x32xf32>
    %305 = arith.negf %304 : vector<1x32xf32>
    %306 = math.exp %305 : vector<1x32xf32>
    %cst_73 = arith.constant 1.000000e+00 : f32
    %307 = vector.broadcast %cst_73 : f32 to vector<1x32xf32>
    %308 = arith.addf %307, %306 : vector<1x32xf32>
    %309 = arith.divf %307, %308 : vector<1x32xf32>
    %310 = vector.extract_strided_slice %309 {offsets = [0, 0], sizes = [1, 8], strides = [1, 1]} : vector<1x32xf32> to vector<1x8xf32>
    %311 = vector.extract_strided_slice %309 {offsets = [0, 8], sizes = [1, 8], strides = [1, 1]} : vector<1x32xf32> to vector<1x8xf32>
    %312 = vector.extract_strided_slice %309 {offsets = [0, 16], sizes = [1, 8], strides = [1, 1]} : vector<1x32xf32> to vector<1x8xf32>
    %cst_74 = arith.constant 2.000000e+00 : f32
    %313 = vector.broadcast %cst_74 : f32 to vector<1x8xf32>
    %314 = arith.mulf %313, %312 : vector<1x8xf32>
    %cst_75 = arith.constant 1.000000e+00 : f32
    %315 = vector.broadcast %cst_75 : f32 to vector<1x8xf32>
    %316 = arith.subf %314, %315 : vector<1x8xf32>
    %317 = vector.extract_strided_slice %309 {offsets = [0, 24], sizes = [1, 8], strides = [1, 1]} : vector<1x32xf32> to vector<1x8xf32>
    %318 = arith.mulf %311, %267 : vector<1x8xf32>
    %319 = arith.mulf %310, %316 : vector<1x8xf32>
    %320 = arith.addf %318, %319 : vector<1x8xf32>
    %321 = math.tanh %320 : vector<1x8xf32>
    %322 = arith.mulf %317, %321 : vector<1x8xf32>
    %cst_76 = arith.constant 0.000000e+00 : f32
    %323 = vector.broadcast %cst_76 : f32 to vector<1x8xf32>
    %324 = arith.maximumf %322, %323 : vector<1x8xf32>
    %325 = arith.mulf %324, %6 : vector<1x8xf32>
    %cst_77 = arith.constant dense<0.000000e+00> : vector<1xf32>
    %326 = vector.multi_reduction <add>, %325, %cst_77 [1] : vector<1x8xf32> to vector<1xf32>
    %327 = vector.shape_cast %326 : vector<1xf32> to vector<1x1xf32>
    %c5_i32 = arith.constant 5 : i32
    %328 = vector.broadcast %c5_i32 : i32 to vector<1x8xi32>
    %329 = arith.cmpi eq, %14, %328 : vector<1x8xi32>
    %330 = vector.shape_cast %327 : vector<1x1xf32> to vector<1x1xf32>
    %331 = vector.broadcast %330 : vector<1x1xf32> to vector<1x8xf32>
    %332 = arith.select %329, %331, %279 : vector<1x8xi1>, vector<1x8xf32>
    %333 = vector.extract_strided_slice %11 {offsets = [6, 0], sizes = [1, 32], strides = [1, 1]} : vector<8x32xf32> to vector<1x32xf32>
    %cst_78 = arith.constant dense<0.000000e+00> : vector<1x32xf32>
    %334 = tpu.matmul %300, %1, %cst_78 {dimension_numbers = #tpu.dot_dimension_numbers<[1], [0], [0], [1], [0, 0, 1, 1], [], []>} : vector<1x8xf32>, vector<8x32xf32>, vector<1x32xf32> -> vector<1x32xf32>
    %335 = arith.addf %333, %334 : vector<1x32xf32>
    %336 = arith.negf %335 : vector<1x32xf32>
    %337 = math.exp %336 : vector<1x32xf32>
    %cst_79 = arith.constant 1.000000e+00 : f32
    %338 = vector.broadcast %cst_79 : f32 to vector<1x32xf32>
    %339 = arith.addf %338, %337 : vector<1x32xf32>
    %340 = arith.divf %338, %339 : vector<1x32xf32>
    %341 = vector.extract_strided_slice %340 {offsets = [0, 0], sizes = [1, 8], strides = [1, 1]} : vector<1x32xf32> to vector<1x8xf32>
    %342 = vector.extract_strided_slice %340 {offsets = [0, 8], sizes = [1, 8], strides = [1, 1]} : vector<1x32xf32> to vector<1x8xf32>
    %343 = vector.extract_strided_slice %340 {offsets = [0, 16], sizes = [1, 8], strides = [1, 1]} : vector<1x32xf32> to vector<1x8xf32>
    %cst_80 = arith.constant 2.000000e+00 : f32
    %344 = vector.broadcast %cst_80 : f32 to vector<1x8xf32>
    %345 = arith.mulf %344, %343 : vector<1x8xf32>
    %cst_81 = arith.constant 1.000000e+00 : f32
    %346 = vector.broadcast %cst_81 : f32 to vector<1x8xf32>
    %347 = arith.subf %345, %346 : vector<1x8xf32>
    %348 = vector.extract_strided_slice %340 {offsets = [0, 24], sizes = [1, 8], strides = [1, 1]} : vector<1x32xf32> to vector<1x8xf32>
    %349 = arith.mulf %342, %298 : vector<1x8xf32>
    %350 = arith.mulf %341, %347 : vector<1x8xf32>
    %351 = arith.addf %349, %350 : vector<1x8xf32>
    %352 = math.tanh %351 : vector<1x8xf32>
    %353 = arith.mulf %348, %352 : vector<1x8xf32>
    %cst_82 = arith.constant dense<0.000000e+00> : vector<1x32xf32>
    %354 = tpu.matmul %353, %2, %cst_82 {dimension_numbers = #tpu.dot_dimension_numbers<[1], [0], [0], [1], [0, 0, 1, 1], [], []>} : vector<1x8xf32>, vector<8x32xf32>, vector<1x32xf32> -> vector<1x32xf32>
    %355 = arith.addf %354, %5 : vector<1x32xf32>
    %cst_83 = arith.constant dense<0.000000e+00> : vector<1x32xf32>
    %356 = tpu.matmul %322, %3, %cst_83 {dimension_numbers = #tpu.dot_dimension_numbers<[1], [0], [0], [1], [0, 0, 1, 1], [], []>} : vector<1x8xf32>, vector<8x32xf32>, vector<1x32xf32> -> vector<1x32xf32>
    %357 = arith.addf %355, %356 : vector<1x32xf32>
    %358 = arith.negf %357 : vector<1x32xf32>
    %359 = math.exp %358 : vector<1x32xf32>
    %cst_84 = arith.constant 1.000000e+00 : f32
    %360 = vector.broadcast %cst_84 : f32 to vector<1x32xf32>
    %361 = arith.addf %360, %359 : vector<1x32xf32>
    %362 = arith.divf %360, %361 : vector<1x32xf32>
    %363 = vector.extract_strided_slice %362 {offsets = [0, 0], sizes = [1, 8], strides = [1, 1]} : vector<1x32xf32> to vector<1x8xf32>
    %364 = vector.extract_strided_slice %362 {offsets = [0, 8], sizes = [1, 8], strides = [1, 1]} : vector<1x32xf32> to vector<1x8xf32>
    %365 = vector.extract_strided_slice %362 {offsets = [0, 16], sizes = [1, 8], strides = [1, 1]} : vector<1x32xf32> to vector<1x8xf32>
    %cst_85 = arith.constant 2.000000e+00 : f32
    %366 = vector.broadcast %cst_85 : f32 to vector<1x8xf32>
    %367 = arith.mulf %366, %365 : vector<1x8xf32>
    %cst_86 = arith.constant 1.000000e+00 : f32
    %368 = vector.broadcast %cst_86 : f32 to vector<1x8xf32>
    %369 = arith.subf %367, %368 : vector<1x8xf32>
    %370 = vector.extract_strided_slice %362 {offsets = [0, 24], sizes = [1, 8], strides = [1, 1]} : vector<1x32xf32> to vector<1x8xf32>
    %371 = arith.mulf %364, %320 : vector<1x8xf32>
    %372 = arith.mulf %363, %369 : vector<1x8xf32>
    %373 = arith.addf %371, %372 : vector<1x8xf32>
    %374 = math.tanh %373 : vector<1x8xf32>
    %375 = arith.mulf %370, %374 : vector<1x8xf32>
    %cst_87 = arith.constant 0.000000e+00 : f32
    %376 = vector.broadcast %cst_87 : f32 to vector<1x8xf32>
    %377 = arith.maximumf %375, %376 : vector<1x8xf32>
    %378 = arith.mulf %377, %6 : vector<1x8xf32>
    %cst_88 = arith.constant dense<0.000000e+00> : vector<1xf32>
    %379 = vector.multi_reduction <add>, %378, %cst_88 [1] : vector<1x8xf32> to vector<1xf32>
    %380 = vector.shape_cast %379 : vector<1xf32> to vector<1x1xf32>
    %c6_i32 = arith.constant 6 : i32
    %381 = vector.broadcast %c6_i32 : i32 to vector<1x8xi32>
    %382 = arith.cmpi eq, %14, %381 : vector<1x8xi32>
    %383 = vector.shape_cast %380 : vector<1x1xf32> to vector<1x1xf32>
    %384 = vector.broadcast %383 : vector<1x1xf32> to vector<1x8xf32>
    %385 = arith.select %382, %384, %332 : vector<1x8xi1>, vector<1x8xf32>
    %386 = vector.extract_strided_slice %11 {offsets = [7, 0], sizes = [1, 32], strides = [1, 1]} : vector<8x32xf32> to vector<1x32xf32>
    %cst_89 = arith.constant dense<0.000000e+00> : vector<1x32xf32>
    %387 = tpu.matmul %353, %1, %cst_89 {dimension_numbers = #tpu.dot_dimension_numbers<[1], [0], [0], [1], [0, 0, 1, 1], [], []>} : vector<1x8xf32>, vector<8x32xf32>, vector<1x32xf32> -> vector<1x32xf32>
    %388 = arith.addf %386, %387 : vector<1x32xf32>
    %389 = arith.negf %388 : vector<1x32xf32>
    %390 = math.exp %389 : vector<1x32xf32>
    %cst_90 = arith.constant 1.000000e+00 : f32
    %391 = vector.broadcast %cst_90 : f32 to vector<1x32xf32>
    %392 = arith.addf %391, %390 : vector<1x32xf32>
    %393 = arith.divf %391, %392 : vector<1x32xf32>
    %394 = vector.extract_strided_slice %393 {offsets = [0, 0], sizes = [1, 8], strides = [1, 1]} : vector<1x32xf32> to vector<1x8xf32>
    %395 = vector.extract_strided_slice %393 {offsets = [0, 8], sizes = [1, 8], strides = [1, 1]} : vector<1x32xf32> to vector<1x8xf32>
    %396 = vector.extract_strided_slice %393 {offsets = [0, 16], sizes = [1, 8], strides = [1, 1]} : vector<1x32xf32> to vector<1x8xf32>
    %cst_91 = arith.constant 2.000000e+00 : f32
    %397 = vector.broadcast %cst_91 : f32 to vector<1x8xf32>
    %398 = arith.mulf %397, %396 : vector<1x8xf32>
    %cst_92 = arith.constant 1.000000e+00 : f32
    %399 = vector.broadcast %cst_92 : f32 to vector<1x8xf32>
    %400 = arith.subf %398, %399 : vector<1x8xf32>
    %401 = vector.extract_strided_slice %393 {offsets = [0, 24], sizes = [1, 8], strides = [1, 1]} : vector<1x32xf32> to vector<1x8xf32>
    %402 = arith.mulf %395, %351 : vector<1x8xf32>
    %403 = arith.mulf %394, %400 : vector<1x8xf32>
    %404 = arith.addf %402, %403 : vector<1x8xf32>
    %405 = math.tanh %404 : vector<1x8xf32>
    %406 = arith.mulf %401, %405 : vector<1x8xf32>
    %cst_93 = arith.constant dense<0.000000e+00> : vector<1x32xf32>
    %407 = tpu.matmul %406, %2, %cst_93 {dimension_numbers = #tpu.dot_dimension_numbers<[1], [0], [0], [1], [0, 0, 1, 1], [], []>} : vector<1x8xf32>, vector<8x32xf32>, vector<1x32xf32> -> vector<1x32xf32>
    %408 = arith.addf %407, %5 : vector<1x32xf32>
    %cst_94 = arith.constant dense<0.000000e+00> : vector<1x32xf32>
    %409 = tpu.matmul %375, %3, %cst_94 {dimension_numbers = #tpu.dot_dimension_numbers<[1], [0], [0], [1], [0, 0, 1, 1], [], []>} : vector<1x8xf32>, vector<8x32xf32>, vector<1x32xf32> -> vector<1x32xf32>
    %410 = arith.addf %408, %409 : vector<1x32xf32>
    %411 = arith.negf %410 : vector<1x32xf32>
    %412 = math.exp %411 : vector<1x32xf32>
    %cst_95 = arith.constant 1.000000e+00 : f32
    %413 = vector.broadcast %cst_95 : f32 to vector<1x32xf32>
    %414 = arith.addf %413, %412 : vector<1x32xf32>
    %415 = arith.divf %413, %414 : vector<1x32xf32>
    %416 = vector.extract_strided_slice %415 {offsets = [0, 0], sizes = [1, 8], strides = [1, 1]} : vector<1x32xf32> to vector<1x8xf32>
    %417 = vector.extract_strided_slice %415 {offsets = [0, 8], sizes = [1, 8], strides = [1, 1]} : vector<1x32xf32> to vector<1x8xf32>
    %418 = vector.extract_strided_slice %415 {offsets = [0, 16], sizes = [1, 8], strides = [1, 1]} : vector<1x32xf32> to vector<1x8xf32>
    %cst_96 = arith.constant 2.000000e+00 : f32
    %419 = vector.broadcast %cst_96 : f32 to vector<1x8xf32>
    %420 = arith.mulf %419, %418 : vector<1x8xf32>
    %cst_97 = arith.constant 1.000000e+00 : f32
    %421 = vector.broadcast %cst_97 : f32 to vector<1x8xf32>
    %422 = arith.subf %420, %421 : vector<1x8xf32>
    %423 = vector.extract_strided_slice %415 {offsets = [0, 24], sizes = [1, 8], strides = [1, 1]} : vector<1x32xf32> to vector<1x8xf32>
    %424 = arith.mulf %417, %373 : vector<1x8xf32>
    %425 = arith.mulf %416, %422 : vector<1x8xf32>
    %426 = arith.addf %424, %425 : vector<1x8xf32>
    %427 = math.tanh %426 : vector<1x8xf32>
    %428 = arith.mulf %423, %427 : vector<1x8xf32>
    %cst_98 = arith.constant 0.000000e+00 : f32
    %429 = vector.broadcast %cst_98 : f32 to vector<1x8xf32>
    %430 = arith.maximumf %428, %429 : vector<1x8xf32>
    %431 = arith.mulf %430, %6 : vector<1x8xf32>
    %cst_99 = arith.constant dense<0.000000e+00> : vector<1xf32>
    %432 = vector.multi_reduction <add>, %431, %cst_99 [1] : vector<1x8xf32> to vector<1xf32>
    %433 = vector.shape_cast %432 : vector<1xf32> to vector<1x1xf32>
    %c7_i32 = arith.constant 7 : i32
    %434 = vector.broadcast %c7_i32 : i32 to vector<1x8xi32>
    %435 = arith.cmpi eq, %14, %434 : vector<1x8xi32>
    %436 = vector.shape_cast %433 : vector<1x1xf32> to vector<1x1xf32>
    %437 = vector.broadcast %436 : vector<1x1xf32> to vector<1x8xf32>
    %438 = arith.select %435, %437, %385 : vector<1x8xi1>, vector<1x8xf32>
    %439 = vector.broadcast %7 : vector<1x1xf32> to vector<1x8xf32>
    %440 = arith.addf %438, %439 : vector<1x8xf32>
    %c0_100 = arith.constant 0 : index
    %c0_101 = arith.constant 0 : index
    %441 = vector.load %arg2[%c0_100, %c0_101] : memref<1x8xf32, #tpu.memory_space<vmem>>, vector<1x8xf32>
    tpu.vector_store %arg2[%c0_100, %c0_101], %440 {strides = array<i32>} : memref<1x8xf32, #tpu.memory_space<vmem>>, vector<1x8xf32>,
    return
  }
}

</mosaic_0001>

<llo_original>
// kernel: tpu_custom_call.1
$region0: #{tpu_custom_call.1}
  #allocation0 [shape = 'u32[]', space=smem, size = 0x4, offset = 0x4, fixed_abs, tag = 'smem constant byte address 0x4 - core index']
  #allocation1 [shape = 'u32[144,128]{1,0:T(1,128)}', space=vmem, size = 0x12000, scoped, tag = 'internal scratch']
  %s0 = inlined_call_operand.hbm [shape: f32[8,16], index: 0, kind: input, shape index: {}]
  %s1 = inlined_call_operand.hbm [shape: f32[48,128], index: 1, kind: input, shape index: {}]
  %s2 = inlined_call_operand.hbm [shape: f32[1,8], index: 2, kind: output, shape index: {}]
  %s3 = sld [smem:[#allocation0]]
  $region26: #{tpu_custom_call.1} parent=0
    _
  %s5 = ssub.s32 1, %s3
  %s6 = scalar_select 0, %s5, %s3
  $region1: #{tpu_custom_call.1} parent=0
    #allocation2 [shape = 'u8[4096]{0}', space=vmem, size = 0x1000, scoped, tag = 'input window, operand 0, single buffered']
    #allocation3 [shape = 's32[1]{0}', space=sflag, size = 0x4, scoped, tag = 'scoped memory for tpu_custom_call.1']
    #allocation4 [shape = 's32[1]{0}', space=sflag, size = 0x4, scoped, tag = 'scoped memory for tpu_custom_call.1']
    #allocation5 [shape = 'u8[24576]{0}', space=vmem, size = 0x6000, scoped, tag = 'input window, operand 1, single buffered']
    #allocation6 [shape = 's32[1]{0}', space=sflag, size = 0x4, scoped, tag = 'scoped memory for tpu_custom_call.1']
    #allocation7 [shape = 'u8[512]{0}', space=vmem, size = 0x400, scoped, tag = 'output window, operand 0, single buffered']
    %7 = vsyncpa [#allocation3], 0
    %8 = vsyncpa [#allocation6], 0
    %9 = vsyncpa [#allocation4], 0
    // Predicated region
    $region2: #{tpu_custom_call.1} parent=1 // pred_check
      _
    $region3: #{tpu_custom_call.1} parent=1 // pred_check_branch
      %11 = sbr.rel (0) target = $region5
    $region4: #{tpu_custom_call.1} parent=1 // pred_region
      %s13 = ssub.s32 128, 128
      %14 = vsyncadd [#allocation3], %s13
      %s16 = sshll.u32 [#allocation2], 4
      %s17 = int_to_ptr.vmem [resolvable:$true] %s16
      %19 = dma.hbm_to_vmem [thread:$0]  %s0, 128, %s17, [#allocation3]
    $region5: #{tpu_custom_call.1} parent=1 // pred_fallthru
      _
    // Predicated region
    $region6: #{tpu_custom_call.1} parent=1 // pred_check
      _
    $region7: #{tpu_custom_call.1} parent=1 // pred_check_branch
      %21 = sbr.rel (0) target = $region9
    $region8: #{tpu_custom_call.1} parent=1 // pred_region
      %s23 = ssub.s32 768, 768
      %24 = vsyncadd [#allocation6], %s23
      %s25 = sshll.u32 [#allocation5], 4
      %s26 = int_to_ptr.vmem [resolvable:$true] %s25
      %31 = dma.hbm_to_vmem [thread:$0]  %s1, 768, %s26, [#allocation6], 128, 128, 8
    $region9: #{tpu_custom_call.1} parent=1 // pred_fallthru
      _
    // Predicated region
    $region10: #{tpu_custom_call.1} parent=1 // pred_check
      _
    $region11: #{tpu_custom_call.1} parent=1 // pred_check_branch
      %33 = sbr.rel (0) target = $region13
    $region12: #{tpu_custom_call.1} parent=1 // pred_region
      %34 = dma.done [#allocation3], 128
    $region13: #{tpu_custom_call.1} parent=1 // pred_fallthru
      _
    // Predicated region
    $region14: #{tpu_custom_call.1} parent=1 // pred_check
      _
    $region15: #{tpu_custom_call.1} parent=1 // pred_check_branch
      %36 = sbr.rel (0) target = $region17
    $region16: #{tpu_custom_call.1} parent=1 // pred_region
      %37 = dma.done [#allocation6], 768
    $region17: #{tpu_custom_call.1} parent=1 // pred_fallthru
      _
    %v38 = vld [vmem:[#allocation5] sm:$0xff]
    %v39 = vld [vmem:[#allocation5 + $0x8] sm:$0xff]
    %v40 = vld [vmem:[#allocation5 + $0x10] sm:$0xff]
    %v41 = vld [vmem:[#allocation5 + $0x18] sm:$0xff]
    %v42 = vld [vmem:[#allocation5 + $0x20] sm:$0xff]
    %v43 = vld [vmem:[#allocation5 + $0x28] sm:$0x1]
    %v44 = vld [vmem:[#allocation5 + $0x29] sm:$0x1]
    %v45 = vld [vmem:[#allocation5 + $0x2a] sm:$0x1]
    %v46 = vld [vmem:[#allocation5 + $0x2b] sm:$0x1]
    %v47 = vld [vmem:[#allocation2] sm:$0xff]
    %v48 = vlaneseq
    %v49 = vshrl.u32 %v48, 7
    %v50 = vsub.s32 0, %v49
    %v51 = vrot.slane %v43, %v50
    %vm52 = vcmask 130048
    %v54 = vsel %vm52, %v47, 0
    %56 = vmatprep.subr.mxu0 0.0
    %57 = vmatpush1.msra.mxu0 0.0
    %58 = vmatprep.subr.mxu0 0.0
    %59 = vmatpush1.msra.mxu0 0.0
    %60 = vmatprep.subr.mxu0 0.0
    %61 = vmatpush1.msra.mxu0 0.0
    %62 = vmatprep.subr.mxu0 0.0
    %63 = vmatpush1.msra.mxu0 0.0
    %64 = vmatprep.subr.mxu0 0.0
    %65 = vmatpush1.msra.mxu0 0.0
    %66 = vmatprep.subr.mxu0 0.0
    %67 = vmatpush1.msra.mxu0 0.0
    %68 = vmatprep.subr.mxu0 0.0
    %69 = vmatpush1.msra.mxu0 0.0
    %70 = vmatprep.subr.mxu0 0.0
    %71 = vmatpush1.msra.mxu0 0.0
    %72 = vmatprep.subr.mxu0 0.0
    %73 = vmatpush1.msra.mxu0 0.0
    %74 = vmatprep.subr.mxu0 0.0
    %75 = vmatpush1.msra.mxu0 0.0
    %76 = vmatprep.subr.mxu0 0.0
    %77 = vmatpush1.msra.mxu0 0.0
    %78 = vmatprep.subr.mxu0 0.0
    %79 = vmatpush1.msra.mxu0 0.0
    %80 = vmatprep.subr.mxu0 0.0
    %81 = vmatpush1.msra.mxu0 0.0
    %82 = vmatprep.subr.mxu0 0.0
    %83 = vmatpush1.msra.mxu0 0.0
    %84 = vmatprep.subr.mxu0 0.0
    %85 = vmatpush1.msra.mxu0 %v39
    %86 = vmatprep.subr.mxu0 0.0
    %87 = vmatpush1.msra.mxu0 %v38
    %88 = vmatprep.subr.mxu0 0.0
    %89 = vmatpush2.msra.mxu0 0.0
    %90 = vmatprep.subr.mxu0 0.0
    %91 = vmatpush2.msra.mxu0 0.0
    %92 = vmatprep.subr.mxu0 0.0
    %93 = vmatpush2.msra.mxu0 0.0
    %94 = vmatprep.subr.mxu0 0.0
    %95 = vmatpush2.msra.mxu0 0.0
    %96 = vmatprep.subr.mxu0 0.0
    %97 = vmatpush2.msra.mxu0 0.0
    %98 = vmatprep.subr.mxu0 0.0
    %99 = vmatpush2.msra.mxu0 0.0
    %100 = vmatprep.subr.mxu0 0.0
    %101 = vmatpush2.msra.mxu0 0.0
    %102 = vmatprep.subr.mxu0 0.0
    %103 = vmatpush2.msra.mxu0 0.0
    %104 = vmatprep.subr.mxu0 0.0
    %105 = vmatpush2.msra.mxu0 0.0
    %106 = vmatprep.subr.mxu0 0.0
    %107 = vmatpush2.msra.mxu0 0.0
    %108 = vmatprep.subr.mxu0 0.0
    %109 = vmatpush2.msra.mxu0 0.0
    %110 = vmatprep.subr.mxu0 0.0
    %111 = vmatpush2.msra.mxu0 0.0
    %112 = vmatprep.subr.mxu0 0.0
    %113 = vmatpush2.msra.mxu0 0.0
    %114 = vmatprep.subr.mxu0 0.0
    %115 = vmatpush2.msra.mxu0 0.0
    %116 = vmatprep.subr.mxu0 0.0
    %117 = vmatpush2.msra.mxu0 0.0
    %118 = vmatprep.subr.mxu0 0.0
    %119 = vmatpush2.msra.mxu0 0.0
    %120 = vmatprep.mubr.f32.mxu0 0.0
    %121 = vmatmul.mubr.f32.gmra.mxu0 %v54
    %v122 = vpop.f32.mrf.mxu0
    %v123 = vadd.f32 %v51, %v122
    %v124 = vpop.f32.mrf.mxu0
    %125 = vdwg.mxu0
    %v126 = vlaneseq
    %v127 = vand.u32 %v126, 127
    %vm128 = vcmask 64512
    %v130 = vsel %vm128, 0.0, 0
    %132 = vmatprep.subr.mxu0 0.0
    %133 = vmatpush1.msra.mxu0 0.0
    %134 = vmatprep.subr.mxu0 0.0
    %135 = vmatpush1.msra.mxu0 0.0
    %136 = vmatprep.subr.mxu0 0.0
    %137 = vmatpush1.msra.mxu0 0.0
    %138 = vmatprep.subr.mxu0 0.0
    %139 = vmatpush1.msra.mxu0 0.0
    %140 = vmatprep.subr.mxu0 0.0
    %141 = vmatpush1.msra.mxu0 0.0
    %142 = vmatprep.subr.mxu0 0.0
    %143 = vmatpush1.msra.mxu0 0.0
    %144 = vmatprep.subr.mxu0 0.0
    %145 = vmatpush1.msra.mxu0 0.0
    %146 = vmatprep.subr.mxu0 0.0
    %147 = vmatpush1.msra.mxu0 0.0
    %148 = vmatprep.subr.mxu0 0.0
    %149 = vmatpush1.msra.mxu0 0.0
    %150 = vmatprep.subr.mxu0 0.0
    %151 = vmatpush1.msra.mxu0 0.0
    %152 = vmatprep.subr.mxu0 0.0
    %153 = vmatpush1.msra.mxu0 0.0
    %154 = vmatprep.subr.mxu0 0.0
    %155 = vmatpush1.msra.mxu0 0.0
    %156 = vmatprep.subr.mxu0 0.0
    %157 = vmatpush1.msra.mxu0 0.0
    %158 = vmatprep.subr.mxu0 0.0
    %159 = vmatpush1.msra.mxu0 0.0
    %160 = vmatprep.subr.mxu0 0.0
    %161 = vmatpush1.msra.mxu0 0.0
    %162 = vmatprep.subr.mxu0 0.0
    %163 = vmatpush1.msra.mxu0 %v40
    %164 = vmatprep.subr.mxu0 0.0
    %165 = vmatpush2.msra.mxu0 0.0
    %166 = vmatprep.subr.mxu0 0.0
    %167 = vmatpush2.msra.mxu0 0.0
    %168 = vmatprep.subr.mxu0 0.0
    %169 = vmatpush2.msra.mxu0 0.0
    %170 = vmatprep.subr.mxu0 0.0
    %171 = vmatpush2.msra.mxu0 0.0
    %172 = vmatprep.subr.mxu0 0.0
    %173 = vmatpush2.msra.mxu0 0.0
    %174 = vmatprep.subr.mxu0 0.0
    %175 = vmatpush2.msra.mxu0 0.0
    %176 = vmatprep.subr.mxu0 0.0
    %177 = vmatpush2.msra.mxu0 0.0
    %178 = vmatprep.subr.mxu0 0.0
    %179 = vmatpush2.msra.mxu0 0.0
    %180 = vmatprep.subr.mxu0 0.0
    %181 = vmatpush2.msra.mxu0 0.0
    %182 = vmatprep.subr.mxu0 0.0
    %183 = vmatpush2.msra.mxu0 0.0
    %184 = vmatprep.subr.mxu0 0.0
    %185 = vmatpush2.msra.mxu0 0.0
    %186 = vmatprep.subr.mxu0 0.0
    %187 = vmatpush2.msra.mxu0 0.0
    %188 = vmatprep.subr.mxu0 0.0
    %189 = vmatpush2.msra.mxu0 0.0
    %190 = vmatprep.subr.mxu0 0.0
    %191 = vmatpush2.msra.mxu0 0.0
    %192 = vmatprep.subr.mxu0 0.0
    %193 = vmatpush2.msra.mxu0 0.0
    %194 = vmatprep.subr.mxu0 0.0
    %195 = vmatpush2.msra.mxu0 0.0
    %196 = vmatprep.mubr.f32.mxu0 0.0
    %197 = vmatmul.mubr.f32.gmra.mxu0 %v130
    %v198 = vpop.f32.mrf.mxu0
    %v199 = vadd.f32 0.0, %v198
    %v200 = vpop.f32.mrf.mxu0
    %201 = vdwg.mxu0
    %v202 = vadd.f32 %v123, %v199
    %v203 = vxor.u32 %v202, 2147483648
    %v204 = vmul.f32 %v203, 1.442695
    %v205 = vpow.pop %v204
    %v206 = vadd.f32 %v205, 1.0
    %v207 = vrcp.pop %v206
    %v208 = vmul.f32 1.0, %v207
    %v209 = vmul.f32 %v208, 2.0
    %v210 = vsub.f32 %v209, 1.0
    %v211 = vmul.f32 %v208, 0.0
    %213 = vrot.lane.b32.xlu0 %v210, 112
    %v214 = vpop.permute.xlu0 %213
    %v216 = vmul.f32 %v208, %v214
    %218 = vrot.lane.b32.xlu0 %v216, 8
    %v219 = vpop.permute.xlu0 %218
    %v221 = vadd.f32 %v211, %v219
    %v222 = vtanh.pop %v221
    %224 = vrot.lane.b32.xlu0 %v222, 16
    %v225 = vpop.permute.xlu0 %224
    %v227 = vmul.f32 %v208, %v225
    %229 = vrot.lane.b32.xlu0 %v227, 104
    %v230 = vpop.permute.xlu0 %229
    %v231 = vsel %vm128, %v230, 0
    %233 = vmatprep.subr.mxu0 0.0
    %234 = vmatpush1.msra.mxu0 0.0
    %235 = vmatprep.subr.mxu0 0.0
    %236 = vmatpush1.msra.mxu0 0.0
    %237 = vmatprep.subr.mxu0 0.0
    %238 = vmatpush1.msra.mxu0 0.0
    %239 = vmatprep.subr.mxu0 0.0
    %240 = vmatpush1.msra.mxu0 0.0
    %241 = vmatprep.subr.mxu0 0.0
    %242 = vmatpush1.msra.mxu0 0.0
    %243 = vmatprep.subr.mxu0 0.0
    %244 = vmatpush1.msra.mxu0 0.0
    %245 = vmatprep.subr.mxu0 0.0
    %246 = vmatpush1.msra.mxu0 0.0
    %247 = vmatprep.subr.mxu0 0.0
    %248 = vmatpush1.msra.mxu0 0.0
    %249 = vmatprep.subr.mxu0 0.0
    %250 = vmatpush1.msra.mxu0 0.0
    %251 = vmatprep.subr.mxu0 0.0
    %252 = vmatpush1.msra.mxu0 0.0
    %253 = vmatprep.subr.mxu0 0.0
    %254 = vmatpush1.msra.mxu0 0.0
    %255 = vmatprep.subr.mxu0 0.0
    %256 = vmatpush1.msra.mxu0 0.0
    %257 = vmatprep.subr.mxu0 0.0
    %258 = vmatpush1.msra.mxu0 0.0
    %259 = vmatprep.subr.mxu0 0.0
    %260 = vmatpush1.msra.mxu0 0.0
    %261 = vmatprep.subr.mxu0 0.0
    %262 = vmatpush1.msra.mxu0 0.0
    %263 = vmatprep.subr.mxu0 0.0
    %264 = vmatpush1.msra.mxu0 %v41
    %265 = vmatprep.subr.mxu0 0.0
    %266 = vmatpush2.msra.mxu0 0.0
    %267 = vmatprep.subr.mxu0 0.0
    %268 = vmatpush2.msra.mxu0 0.0
    %269 = vmatprep.subr.mxu0 0.0
    %270 = vmatpush2.msra.mxu0 0.0
    %271 = vmatprep.subr.mxu0 0.0
    %272 = vmatpush2.msra.mxu0 0.0
    %273 = vmatprep.subr.mxu0 0.0
    %274 = vmatpush2.msra.mxu0 0.0
    %275 = vmatprep.subr.mxu0 0.0
    %276 = vmatpush2.msra.mxu0 0.0
    %277 = vmatprep.subr.mxu0 0.0
    %278 = vmatpush2.msra.mxu0 0.0
    %279 = vmatprep.subr.mxu0 0.0
    %280 = vmatpush2.msra.mxu0 0.0
    %281 = vmatprep.subr.mxu0 0.0
    %282 = vmatpush2.msra.mxu0 0.0
    %283 = vmatprep.subr.mxu0 0.0
    %284 = vmatpush2.msra.mxu0 0.0
    %285 = vmatprep.subr.mxu0 0.0
    %286 = vmatpush2.msra.mxu0 0.0
    %287 = vmatprep.subr.mxu0 0.0
    %288 = vmatpush2.msra.mxu0 0.0
    %289 = vmatprep.subr.mxu0 0.0
    %290 = vmatpush2.msra.mxu0 0.0
    %291 = vmatprep.subr.mxu0 0.0
    %292 = vmatpush2.msra.mxu0 0.0
    %293 = vmatprep.subr.mxu0 0.0
    %294 = vmatpush2.msra.mxu0 0.0
    %295 = vmatprep.subr.mxu0 0.0
    %296 = vmatpush2.msra.mxu0 0.0
    %297 = vmatprep.mubr.f32.mxu0 0.0
    %298 = vmatmul.mubr.f32.gmra.mxu0 %v231
    %v299 = vpop.f32.mrf.mxu0
    %v300 = vadd.f32 %v44, %v299
    %v301 = vpop.f32.mrf.mxu0
    %302 = vdwg.mxu0
    %303 = vmatprep.subr.mxu0 0.0
    %304 = vmatpush1.msra.mxu0 0.0
    %305 = vmatprep.subr.mxu0 0.0
    %306 = vmatpush1.msra.mxu0 0.0
    %307 = vmatprep.subr.mxu0 0.0
    %308 = vmatpush1.msra.mxu0 0.0
    %309 = vmatprep.subr.mxu0 0.0
    %310 = vmatpush1.msra.mxu0 0.0
    %311 = vmatprep.subr.mxu0 0.0
    %312 = vmatpush1.msra.mxu0 0.0
    %313 = vmatprep.subr.mxu0 0.0
    %314 = vmatpush1.msra.mxu0 0.0
    %315 = vmatprep.subr.mxu0 0.0
    %316 = vmatpush1.msra.mxu0 0.0
    %317 = vmatprep.subr.mxu0 0.0
    %318 = vmatpush1.msra.mxu0 0.0
    %319 = vmatprep.subr.mxu0 0.0
    %320 = vmatpush1.msra.mxu0 0.0
    %321 = vmatprep.subr.mxu0 0.0
    %322 = vmatpush1.msra.mxu0 0.0
    %323 = vmatprep.subr.mxu0 0.0
    %324 = vmatpush1.msra.mxu0 0.0
    %325 = vmatprep.subr.mxu0 0.0
    %326 = vmatpush1.msra.mxu0 0.0
    %327 = vmatprep.subr.mxu0 0.0
    %328 = vmatpush1.msra.mxu0 0.0
    %329 = vmatprep.subr.mxu0 0.0
    %330 = vmatpush1.msra.mxu0 0.0
    %331 = vmatprep.subr.mxu0 0.0
    %332 = vmatpush1.msra.mxu0 0.0
    %333 = vmatprep.subr.mxu0 0.0
    %334 = vmatpush1.msra.mxu0 %v42
    %335 = vmatprep.subr.mxu0 0.0
    %336 = vmatpush2.msra.mxu0 0.0
    %337 = vmatprep.subr.mxu0 0.0
    %338 = vmatpush2.msra.mxu0 0.0
    %339 = vmatprep.subr.mxu0 0.0
    %340 = vmatpush2.msra.mxu0 0.0
    %341 = vmatprep.subr.mxu0 0.0
    %342 = vmatpush2.msra.mxu0 0.0
    %343 = vmatprep.subr.mxu0 0.0
    %344 = vmatpush2.msra.mxu0 0.0
    %345 = vmatprep.subr.mxu0 0.0
    %346 = vmatpush2.msra.mxu0 0.0
    %347 = vmatprep.subr.mxu0 0.0
    %348 = vmatpush2.msra.mxu0 0.0
    %349 = vmatprep.subr.mxu0 0.0
    %350 = vmatpush2.msra.mxu0 0.0
    %351 = vmatprep.subr.mxu0 0.0
    %352 = vmatpush2.msra.mxu0 0.0
    %353 = vmatprep.subr.mxu0 0.0
    %354 = vmatpush2.msra.mxu0 0.0
    %355 = vmatprep.subr.mxu0 0.0
    %356 = vmatpush2.msra.mxu0 0.0
    %357 = vmatprep.subr.mxu0 0.0
    %358 = vmatpush2.msra.mxu0 0.0
    %359 = vmatprep.subr.mxu0 0.0
    %360 = vmatpush2.msra.mxu0 0.0
    %361 = vmatprep.subr.mxu0 0.0
    %362 = vmatpush2.msra.mxu0 0.0
    %363 = vmatprep.subr.mxu0 0.0
    %364 = vmatpush2.msra.mxu0 0.0
    %365 = vmatprep.subr.mxu0 0.0
    %366 = vmatpush2.msra.mxu0 0.0
    %367 = vmatprep.mubr.f32.mxu0 0.0
    %368 = vmatmul.mubr.f32.gmra.mxu0 %v130
    %v369 = vpop.f32.mrf.mxu0
    %v370 = vadd.f32 0.0, %v369
    %v371 = vpop.f32.mrf.mxu0
    %372 = vdwg.mxu0
    %v373 = vadd.f32 %v300, %v370
    %v374 = vxor.u32 %v373, 2147483648
    %v375 = vmul.f32 %v374, 1.442695
    %v376 = vpow.pop %v375
    %v377 = vadd.f32 %v376, 1.0
    %v378 = vrcp.pop %v377
    %v379 = vmul.f32 1.0, %v378
    %v380 = vmul.f32 %v379, 2.0
    %v381 = vsub.f32 %v380, 1.0
    %v382 = vmul.f32 %v379, 0.0
    %384 = vrot.lane.b32.xlu0 %v381, 112
    %v385 = vpop.permute.xlu0 %384
    %v387 = vmul.f32 %v379, %v385
    %389 = vrot.lane.b32.xlu0 %v387, 8
    %v390 = vpop.permute.xlu0 %389
    %v392 = vadd.f32 %v382, %v390
    %v393 = vtanh.pop %v392
    %395 = vrot.lane.b32.xlu0 %v393, 16
    %v396 = vpop.permute.xlu0 %395
    %v398 = vmul.f32 %v379, %v396
    %v399 = vmax.f32 %v398, 0.0
    %401 = vrot.lane.b32.xlu0 %v45, 24
    %v402 = vpop.permute.xlu0 %401
    %v404 = vmul.f32 %v399, %v402
    %406 = vrot.lane.b32.xlu0 %v404, 104
    %v407 = vpop.permute.xlu0 %406
    %vm409 = vcmask 57344
    %v410 = vsel %vm409, %v407, 0.0
    %411 = vadd.xlane.f32.xlu0 %v410
    %v412 = vpop.xlane.xlu0 %411
    %vm413 = vcmp.eq.s32.totalorder %v127, 0
    %v414 = vsel %vm413, %v412, 0.0
    %415 = vmatprep.subr.mxu0 0.0
    %416 = vmatpush1.msra.mxu0 0.0
    %417 = vmatprep.subr.mxu0 0.0
    %418 = vmatpush1.msra.mxu0 0.0
    %419 = vmatprep.subr.mxu0 0.0
    %420 = vmatpush1.msra.mxu0 0.0
    %421 = vmatprep.subr.mxu0 0.0
    %422 = vmatpush1.msra.mxu0 0.0
    %423 = vmatprep.subr.mxu0 0.0
    %424 = vmatpush1.msra.mxu0 0.0
    %425 = vmatprep.subr.mxu0 0.0
    %426 = vmatpush1.msra.mxu0 0.0
    %427 = vmatprep.subr.mxu0 0.0
    %428 = vmatpush1.msra.mxu0 0.0
    %429 = vmatprep.subr.mxu0 0.0
    %430 = vmatpush1.msra.mxu0 0.0
    %431 = vmatprep.subr.mxu0 0.0
    %432 = vmatpush1.msra.mxu0 0.0
    %433 = vmatprep.subr.mxu0 0.0
    %434 = vmatpush1.msra.mxu0 0.0
    %435 = vmatprep.subr.mxu0 0.0
    %436 = vmatpush1.msra.mxu0 0.0
    %437 = vmatprep.subr.mxu0 0.0
    %438 = vmatpush1.msra.mxu0 0.0
    %439 = vmatprep.subr.mxu0 0.0
    %440 = vmatpush1.msra.mxu0 0.0
    %441 = vmatprep.subr.mxu0 0.0
    %442 = vmatpush1.msra.mxu0 0.0
    %443 = vmatprep.subr.mxu0 0.0
    %444 = vmatpush1.msra.mxu0 0.0
    %445 = vmatprep.subr.mxu0 0.0
    %446 = vmatpush1.msra.mxu0 %v40
    %447 = vmatprep.subr.mxu0 0.0
    %448 = vmatpush2.msra.mxu0 0.0
    %449 = vmatprep.subr.mxu0 0.0
    %450 = vmatpush2.msra.mxu0 0.0
    %451 = vmatprep.subr.mxu0 0.0
    %452 = vmatpush2.msra.mxu0 0.0
    %453 = vmatprep.subr.mxu0 0.0
    %454 = vmatpush2.msra.mxu0 0.0
    %455 = vmatprep.subr.mxu0 0.0
    %456 = vmatpush2.msra.mxu0 0.0
    %457 = vmatprep.subr.mxu0 0.0
    %458 = vmatpush2.msra.mxu0 0.0
    %459 = vmatprep.subr.mxu0 0.0
    %460 = vmatpush2.msra.mxu0 0.0
    %461 = vmatprep.subr.mxu0 0.0
    %462 = vmatpush2.msra.mxu0 0.0
    %463 = vmatprep.subr.mxu0 0.0
    %464 = vmatpush2.msra.mxu0 0.0
    %465 = vmatprep.subr.mxu0 0.0
    %466 = vmatpush2.msra.mxu0 0.0
    %467 = vmatprep.subr.mxu0 0.0
    %468 = vmatpush2.msra.mxu0 0.0
    %469 = vmatprep.subr.mxu0 0.0
    %470 = vmatpush2.msra.mxu0 0.0
    %471 = vmatprep.subr.mxu0 0.0
    %472 = vmatpush2.msra.mxu0 0.0
    %473 = vmatprep.subr.mxu0 0.0
    %474 = vmatpush2.msra.mxu0 0.0
    %475 = vmatprep.subr.mxu0 0.0
    %476 = vmatpush2.msra.mxu0 0.0
    %477 = vmatprep.subr.mxu0 0.0
    %478 = vmatpush2.msra.mxu0 0.0
    %479 = vmatprep.mubr.f32.mxu0 0.0
    %480 = vmatmul.mubr.f32.gmra.mxu0 %v231
    %v481 = vpop.f32.mrf.mxu0
    %v482 = vadd.f32 0.0, %v481
    %v483 = vpop.f32.mrf.mxu0
    %484 = vdwg.mxu0
    %v486 = vrot.slane %v482, 7
    %v488 = vadd.f32 %v123, %v486
    %v489 = vxor.u32 %v488, 2147483648
    %v490 = vmul.f32 %v489, 1.442695
    %v491 = vpow.pop %v490
    %v492 = vadd.f32 %v491, 1.0
    %v493 = vrcp.pop %v492
    %v494 = vmul.f32 1.0, %v493
    %v495 = vmul.f32 %v494, 2.0
    %v496 = vsub.f32 %v495, 1.0
    %v498 = vrot.slane %v221, 7
    %v500 = vmul.f32 %v494, %v498
    %502 = vrot.lane.b32.xlu0 %v496, 112
    %v503 = vpop.permute.xlu0 %502
    %v505 = vmul.f32 %v494, %v503
    %507 = vrot.lane.b32.xlu0 %v505, 8
    %v508 = vpop.permute.xlu0 %507
    %v510 = vadd.f32 %v500, %v508
    %v511 = vtanh.pop %v510
    %513 = vrot.lane.b32.xlu0 %v511, 16
    %v514 = vpop.permute.xlu0 %513
    %v516 = vmul.f32 %v494, %v514
    %v518 = vrot.slane %v516, 1
    %519 = vrot.lane.b32.xlu0 %v518, 104
    %v520 = vpop.permute.xlu0 %519
    %v521 = vsel %vm128, %v520, 0
    %523 = vmatprep.subr.mxu0 0.0
    %524 = vmatpush1.msra.mxu0 0.0
    %525 = vmatprep.subr.mxu0 0.0
    %526 = vmatpush1.msra.mxu0 0.0
    %527 = vmatprep.subr.mxu0 0.0
    %528 = vmatpush1.msra.mxu0 0.0
    %529 = vmatprep.subr.mxu0 0.0
    %530 = vmatpush1.msra.mxu0 0.0
    %531 = vmatprep.subr.mxu0 0.0
    %532 = vmatpush1.msra.mxu0 0.0
    %533 = vmatprep.subr.mxu0 0.0
    %534 = vmatpush1.msra.mxu0 0.0
    %535 = vmatprep.subr.mxu0 0.0
    %536 = vmatpush1.msra.mxu0 0.0
    %537 = vmatprep.subr.mxu0 0.0
    %538 = vmatpush1.msra.mxu0 0.0
    %539 = vmatprep.subr.mxu0 0.0
    %540 = vmatpush1.msra.mxu0 0.0
    %541 = vmatprep.subr.mxu0 0.0
    %542 = vmatpush1.msra.mxu0 0.0
    %543 = vmatprep.subr.mxu0 0.0
    %544 = vmatpush1.msra.mxu0 0.0
    %545 = vmatprep.subr.mxu0 0.0
    %546 = vmatpush1.msra.mxu0 0.0
    %547 = vmatprep.subr.mxu0 0.0
    %548 = vmatpush1.msra.mxu0 0.0
    %549 = vmatprep.subr.mxu0 0.0
    %550 = vmatpush1.msra.mxu0 0.0
    %551 = vmatprep.subr.mxu0 0.0
    %552 = vmatpush1.msra.mxu0 0.0
    %553 = vmatprep.subr.mxu0 0.0
    %554 = vmatpush1.msra.mxu0 %v41
    %555 = vmatprep.subr.mxu0 0.0
    %556 = vmatpush2.msra.mxu0 0.0
    %557 = vmatprep.subr.mxu0 0.0
    %558 = vmatpush2.msra.mxu0 0.0
    %559 = vmatprep.subr.mxu0 0.0
    %560 = vmatpush2.msra.mxu0 0.0
    %561 = vmatprep.subr.mxu0 0.0
    %562 = vmatpush2.msra.mxu0 0.0
    %563 = vmatprep.subr.mxu0 0.0
    %564 = vmatpush2.msra.mxu0 0.0
    %565 = vmatprep.subr.mxu0 0.0
    %566 = vmatpush2.msra.mxu0 0.0
    %567 = vmatprep.subr.mxu0 0.0
    %568 = vmatpush2.msra.mxu0 0.0
    %569 = vmatprep.subr.mxu0 0.0
    %570 = vmatpush2.msra.mxu0 0.0
    %571 = vmatprep.subr.mxu0 0.0
    %572 = vmatpush2.msra.mxu0 0.0
    %573 = vmatprep.subr.mxu0 0.0
    %574 = vmatpush2.msra.mxu0 0.0
    %575 = vmatprep.subr.mxu0 0.0
    %576 = vmatpush2.msra.mxu0 0.0
    %577 = vmatprep.subr.mxu0 0.0
    %578 = vmatpush2.msra.mxu0 0.0
    %579 = vmatprep.subr.mxu0 0.0
    %580 = vmatpush2.msra.mxu0 0.0
    %581 = vmatprep.subr.mxu0 0.0
    %582 = vmatpush2.msra.mxu0 0.0
    %583 = vmatprep.subr.mxu0 0.0
    %584 = vmatpush2.msra.mxu0 0.0
    %585 = vmatprep.subr.mxu0 0.0
    %586 = vmatpush2.msra.mxu0 0.0
    %587 = vmatprep.mubr.f32.mxu0 0.0
    %588 = vmatmul.mubr.f32.gmra.mxu0 %v521
    %v589 = vpop.f32.mrf.mxu0
    %v590 = vadd.f32 %v44, %v589
    %v591 = vpop.f32.mrf.mxu0
    %592 = vdwg.mxu0
    %594 = vrot.lane.b32.xlu0 %v398, 104
    %v595 = vpop.permute.xlu0 %594
    %v596 = vsel %vm128, %v595, 0
    %598 = vmatprep.subr.mxu0 0.0
    %599 = vmatpush1.msra.mxu0 0.0
    %600 = vmatprep.subr.mxu0 0.0
    %601 = vmatpush1.msra.mxu0 0.0
    %602 = vmatprep.subr.mxu0 0.0
    %603 = vmatpush1.msra.mxu0 0.0
    %604 = vmatprep.subr.mxu0 0.0
    %605 = vmatpush1.msra.mxu0 0.0
    %606 = vmatprep.subr.mxu0 0.0
    %607 = vmatpush1.msra.mxu0 0.0
    %608 = vmatprep.subr.mxu0 0.0
    %609 = vmatpush1.msra.mxu0 0.0
    %610 = vmatprep.subr.mxu0 0.0
    %611 = vmatpush1.msra.mxu0 0.0
    %612 = vmatprep.subr.mxu0 0.0
    %613 = vmatpush1.msra.mxu0 0.0
    %614 = vmatprep.subr.mxu0 0.0
    %615 = vmatpush1.msra.mxu0 0.0
    %616 = vmatprep.subr.mxu0 0.0
    %617 = vmatpush1.msra.mxu0 0.0
    %618 = vmatprep.subr.mxu0 0.0
    %619 = vmatpush1.msra.mxu0 0.0
    %620 = vmatprep.subr.mxu0 0.0
    %621 = vmatpush1.msra.mxu0 0.0
    %622 = vmatprep.subr.mxu0 0.0
    %623 = vmatpush1.msra.mxu0 0.0
    %624 = vmatprep.subr.mxu0 0.0
    %625 = vmatpush1.msra.mxu0 0.0
    %626 = vmatprep.subr.mxu0 0.0
    %627 = vmatpush1.msra.mxu0 0.0
    %628 = vmatprep.subr.mxu0 0.0
    %629 = vmatpush1.msra.mxu0 %v42
    %630 = vmatprep.subr.mxu0 0.0
    %631 = vmatpush2.msra.mxu0 0.0
    %632 = vmatprep.subr.mxu0 0.0
    %633 = vmatpush2.msra.mxu0 0.0
    %634 = vmatprep.subr.mxu0 0.0
    %635 = vmatpush2.msra.mxu0 0.0
    %636 = vmatprep.subr.mxu0 0.0
    %637 = vmatpush2.msra.mxu0 0.0
    %638 = vmatprep.subr.mxu0 0.0
    %639 = vmatpush2.msra.mxu0 0.0
    %640 = vmatprep.subr.mxu0 0.0
    %641 = vmatpush2.msra.mxu0 0.0
    %642 = vmatprep.subr.mxu0 0.0
    %643 = vmatpush2.msra.mxu0 0.0
    %644 = vmatprep.subr.mxu0 0.0
    %645 = vmatpush2.msra.mxu0 0.0
    %646 = vmatprep.subr.mxu0 0.0
    %647 = vmatpush2.msra.mxu0 0.0
    %648 = vmatprep.subr.mxu0 0.0
    %649 = vmatpush2.msra.mxu0 0.0
    %650 = vmatprep.subr.mxu0 0.0
    %651 = vmatpush2.msra.mxu0 0.0
    %652 = vmatprep.subr.mxu0 0.0
    %653 = vmatpush2.msra.mxu0 0.0
    %654 = vmatprep.subr.mxu0 0.0
    %655 = vmatpush2.msra.mxu0 0.0
    %656 = vmatprep.subr.mxu0 0.0
    %657 = vmatpush2.msra.mxu0 0.0
    %658 = vmatprep.subr.mxu0 0.0
    %659 = vmatpush2.msra.mxu0 0.0
    %660 = vmatprep.subr.mxu0 0.0
    %661 = vmatpush2.msra.mxu0 0.0
    %662 = vmatprep.mubr.f32.mxu0 0.0
    %663 = vmatmul.mubr.f32.gmra.mxu0 %v596
    %v664 = vpop.f32.mrf.mxu0
    %v665 = vadd.f32 0.0, %v664
    %v666 = vpop.f32.mrf.mxu0
    %667 = vdwg.mxu0
    %v668 = vadd.f32 %v590, %v665
    %v669 = vxor.u32 %v668, 2147483648
    %v670 = vmul.f32 %v669, 1.442695
    %v671 = vpow.pop %v670
    %v672 = vadd.f32 %v671, 1.0
    %v673 = vrcp.pop %v672
    %v674 = vmul.f32 1.0, %v673
    %v675 = vmul.f32 %v674, 2.0
    %v676 = vsub.f32 %v675, 1.0
    %v677 = vmul.f32 %v674, %v392
    %679 = vrot.lane.b32.xlu0 %v676, 112
    %v680 = vpop.permute.xlu0 %679
    %v682 = vmul.f32 %v674, %v680
    %684 = vrot.lane.b32.xlu0 %v682, 8
    %v685 = vpop.permute.xlu0 %684
    %v687 = vadd.f32 %v677, %v685
    %v688 = vtanh.pop %v687
    %690 = vrot.lane.b32.xlu0 %v688, 16
    %v691 = vpop.permute.xlu0 %690
    %v693 = vmul.f32 %v674, %v691
    %v694 = vmax.f32 %v693, 0.0
    %v695 = vmul.f32 %v694, %v402
    %697 = vrot.lane.b32.xlu0 %v695, 104
    %v698 = vpop.permute.xlu0 %697
    %v700 = vsel %vm409, %v698, 0.0
    %701 = vadd.xlane.f32.xlu0 %v700
    %v702 = vpop.xlane.xlu0 %701
    %vm703 = vcmp.eq.s32.totalorder %v127, 1
    %v704 = vsel %vm703, %v702, %v414
    %705 = vmatprep.subr.mxu0 0.0
    %706 = vmatpush1.msra.mxu0 0.0
    %707 = vmatprep.subr.mxu0 0.0
    %708 = vmatpush1.msra.mxu0 0.0
    %709 = vmatprep.subr.mxu0 0.0
    %710 = vmatpush1.msra.mxu0 0.0
    %711 = vmatprep.subr.mxu0 0.0
    %712 = vmatpush1.msra.mxu0 0.0
    %713 = vmatprep.subr.mxu0 0.0
    %714 = vmatpush1.msra.mxu0 0.0
    %715 = vmatprep.subr.mxu0 0.0
    %716 = vmatpush1.msra.mxu0 0.0
    %717 = vmatprep.subr.mxu0 0.0
    %718 = vmatpush1.msra.mxu0 0.0
    %719 = vmatprep.subr.mxu0 0.0
    %720 = vmatpush1.msra.mxu0 0.0
    %721 = vmatprep.subr.mxu0 0.0
    %722 = vmatpush1.msra.mxu0 0.0
    %723 = vmatprep.subr.mxu0 0.0
    %724 = vmatpush1.msra.mxu0 0.0
    %725 = vmatprep.subr.mxu0 0.0
    %726 = vmatpush1.msra.mxu0 0.0
    %727 = vmatprep.subr.mxu0 0.0
    %728 = vmatpush1.msra.mxu0 0.0
    %729 = vmatprep.subr.mxu0 0.0
    %730 = vmatpush1.msra.mxu0 0.0
    %731 = vmatprep.subr.mxu0 0.0
    %732 = vmatpush1.msra.mxu0 0.0
    %733 = vmatprep.subr.mxu0 0.0
    %734 = vmatpush1.msra.mxu0 0.0
    %735 = vmatprep.subr.mxu0 0.0
    %736 = vmatpush1.msra.mxu0 %v40
    %737 = vmatprep.subr.mxu0 0.0
    %738 = vmatpush2.msra.mxu0 0.0
    %739 = vmatprep.subr.mxu0 0.0
    %740 = vmatpush2.msra.mxu0 0.0
    %741 = vmatprep.subr.mxu0 0.0
    %742 = vmatpush2.msra.mxu0 0.0
    %743 = vmatprep.subr.mxu0 0.0
    %744 = vmatpush2.msra.mxu0 0.0
    %745 = vmatprep.subr.mxu0 0.0
    %746 = vmatpush2.msra.mxu0 0.0
    %747 = vmatprep.subr.mxu0 0.0
    %748 = vmatpush2.msra.mxu0 0.0
    %749 = vmatprep.subr.mxu0 0.0
    %750 = vmatpush2.msra.mxu0 0.0
    %751 = vmatprep.subr.mxu0 0.0
    %752 = vmatpush2.msra.mxu0 0.0
    %753 = vmatprep.subr.mxu0 0.0
    %754 = vmatpush2.msra.mxu0 0.0
    %755 = vmatprep.subr.mxu0 0.0
    %756 = vmatpush2.msra.mxu0 0.0
    %757 = vmatprep.subr.mxu0 0.0
    %758 = vmatpush2.msra.mxu0 0.0
    %759 = vmatprep.subr.mxu0 0.0
    %760 = vmatpush2.msra.mxu0 0.0
    %761 = vmatprep.subr.mxu0 0.0
    %762 = vmatpush2.msra.mxu0 0.0
    %763 = vmatprep.subr.mxu0 0.0
    %764 = vmatpush2.msra.mxu0 0.0
    %765 = vmatprep.subr.mxu0 0.0
    %766 = vmatpush2.msra.mxu0 0.0
    %767 = vmatprep.subr.mxu0 0.0
    %768 = vmatpush2.msra.mxu0 0.0
    %769 = vmatprep.mubr.f32.mxu0 0.0
    %770 = vmatmul.mubr.f32.gmra.mxu0 %v521
    %v771 = vpop.f32.mrf.mxu0
    %v772 = vadd.f32 0.0, %v771
    %v773 = vpop.f32.mrf.mxu0
    %774 = vdwg.mxu0
    %v776 = vrot.slane %v772, 6
    %v778 = vadd.f32 %v123, %v776
    %v779 = vxor.u32 %v778, 2147483648
    %v780 = vmul.f32 %v779, 1.442695
    %v781 = vpow.pop %v780
    %v782 = vadd.f32 %v781, 1.0
    %v783 = vrcp.pop %v782
    %v784 = vmul.f32 1.0, %v783
    %v785 = vmul.f32 %v784, 2.0
    %v786 = vsub.f32 %v785, 1.0
    %v788 = vrot.slane %v510, 7
    %v790 = vmul.f32 %v784, %v788
    %792 = vrot.lane.b32.xlu0 %v786, 112
    %v793 = vpop.permute.xlu0 %792
    %v795 = vmul.f32 %v784, %v793
    %797 = vrot.lane.b32.xlu0 %v795, 8
    %v798 = vpop.permute.xlu0 %797
    %v800 = vadd.f32 %v790, %v798
    %v801 = vtanh.pop %v800
    %803 = vrot.lane.b32.xlu0 %v801, 16
    %v804 = vpop.permute.xlu0 %803
    %v806 = vmul.f32 %v784, %v804
    %v808 = vrot.slane %v806, 2
    %809 = vrot.lane.b32.xlu0 %v808, 104
    %v810 = vpop.permute.xlu0 %809
    %v811 = vsel %vm128, %v810, 0
    %813 = vmatprep.subr.mxu0 0.0
    %814 = vmatpush1.msra.mxu0 0.0
    %815 = vmatprep.subr.mxu0 0.0
    %816 = vmatpush1.msra.mxu0 0.0
    %817 = vmatprep.subr.mxu0 0.0
    %818 = vmatpush1.msra.mxu0 0.0
    %819 = vmatprep.subr.mxu0 0.0
    %820 = vmatpush1.msra.mxu0 0.0
    %821 = vmatprep.subr.mxu0 0.0
    %822 = vmatpush1.msra.mxu0 0.0
    %823 = vmatprep.subr.mxu0 0.0
    %824 = vmatpush1.msra.mxu0 0.0
    %825 = vmatprep.subr.mxu0 0.0
    %826 = vmatpush1.msra.mxu0 0.0
    %827 = vmatprep.subr.mxu0 0.0
    %828 = vmatpush1.msra.mxu0 0.0
    %829 = vmatprep.subr.mxu0 0.0
    %830 = vmatpush1.msra.mxu0 0.0
    %831 = vmatprep.subr.mxu0 0.0
    %832 = vmatpush1.msra.mxu0 0.0
    %833 = vmatprep.subr.mxu0 0.0
    %834 = vmatpush1.msra.mxu0 0.0
    %835 = vmatprep.subr.mxu0 0.0
    %836 = vmatpush1.msra.mxu0 0.0
    %837 = vmatprep.subr.mxu0 0.0
    %838 = vmatpush1.msra.mxu0 0.0
    %839 = vmatprep.subr.mxu0 0.0
    %840 = vmatpush1.msra.mxu0 0.0
    %841 = vmatprep.subr.mxu0 0.0
    %842 = vmatpush1.msra.mxu0 0.0
    %843 = vmatprep.subr.mxu0 0.0
    %844 = vmatpush1.msra.mxu0 %v41
    %845 = vmatprep.subr.mxu0 0.0
    %846 = vmatpush2.msra.mxu0 0.0
    %847 = vmatprep.subr.mxu0 0.0
    %848 = vmatpush2.msra.mxu0 0.0
    %849 = vmatprep.subr.mxu0 0.0
    %850 = vmatpush2.msra.mxu0 0.0
    %851 = vmatprep.subr.mxu0 0.0
    %852 = vmatpush2.msra.mxu0 0.0
    %853 = vmatprep.subr.mxu0 0.0
    %854 = vmatpush2.msra.mxu0 0.0
    %855 = vmatprep.subr.mxu0 0.0
    %856 = vmatpush2.msra.mxu0 0.0
    %857 = vmatprep.subr.mxu0 0.0
    %858 = vmatpush2.msra.mxu0 0.0
    %859 = vmatprep.subr.mxu0 0.0
    %860 = vmatpush2.msra.mxu0 0.0
    %861 = vmatprep.subr.mxu0 0.0
    %862 = vmatpush2.msra.mxu0 0.0
    %863 = vmatprep.subr.mxu0 0.0
    %864 = vmatpush2.msra.mxu0 0.0
    %865 = vmatprep.subr.mxu0 0.0
    %866 = vmatpush2.msra.mxu0 0.0
    %867 = vmatprep.subr.mxu0 0.0
    %868 = vmatpush2.msra.mxu0 0.0
    %869 = vmatprep.subr.mxu0 0.0
    %870 = vmatpush2.msra.mxu0 0.0
    %871 = vmatprep.subr.mxu0 0.0
    %872 = vmatpush2.msra.mxu0 0.0
    %873 = vmatprep.subr.mxu0 0.0
    %874 = vmatpush2.msra.mxu0 0.0
    %875 = vmatprep.subr.mxu0 0.0
    %876 = vmatpush2.msra.mxu0 0.0
    %877 = vmatprep.mubr.f32.mxu0 0.0
    %878 = vmatmul.mubr.f32.gmra.mxu0 %v811
    %v879 = vpop.f32.mrf.mxu0
    %v880 = vadd.f32 %v44, %v879
    %v881 = vpop.f32.mrf.mxu0
    %882 = vdwg.mxu0
    %884 = vrot.lane.b32.xlu0 %v693, 104
    %v885 = vpop.permute.xlu0 %884
    %v886 = vsel %vm128, %v885, 0
    %888 = vmatprep.subr.mxu0 0.0
    %889 = vmatpush1.msra.mxu0 0.0
    %890 = vmatprep.subr.mxu0 0.0
    %891 = vmatpush1.msra.mxu0 0.0
    %892 = vmatprep.subr.mxu0 0.0
    %893 = vmatpush1.msra.mxu0 0.0
    %894 = vmatprep.subr.mxu0 0.0
    %895 = vmatpush1.msra.mxu0 0.0
    %896 = vmatprep.subr.mxu0 0.0
    %897 = vmatpush1.msra.mxu0 0.0
    %898 = vmatprep.subr.mxu0 0.0
    %899 = vmatpush1.msra.mxu0 0.0
    %900 = vmatprep.subr.mxu0 0.0
    %901 = vmatpush1.msra.mxu0 0.0
    %902 = vmatprep.subr.mxu0 0.0
    %903 = vmatpush1.msra.mxu0 0.0
    %904 = vmatprep.subr.mxu0 0.0
    %905 = vmatpush1.msra.mxu0 0.0
    %906 = vmatprep.subr.mxu0 0.0
    %907 = vmatpush1.msra.mxu0 0.0
    %908 = vmatprep.subr.mxu0 0.0
    %909 = vmatpush1.msra.mxu0 0.0
    %910 = vmatprep.subr.mxu0 0.0
    %911 = vmatpush1.msra.mxu0 0.0
    %912 = vmatprep.subr.mxu0 0.0
    %913 = vmatpush1.msra.mxu0 0.0
    %914 = vmatprep.subr.mxu0 0.0
    %915 = vmatpush1.msra.mxu0 0.0
    %916 = vmatprep.subr.mxu0 0.0
    %917 = vmatpush1.msra.mxu0 0.0
    %918 = vmatprep.subr.mxu0 0.0
    %919 = vmatpush1.msra.mxu0 %v42
    %920 = vmatprep.subr.mxu0 0.0
    %921 = vmatpush2.msra.mxu0 0.0
    %922 = vmatprep.subr.mxu0 0.0
    %923 = vmatpush2.msra.mxu0 0.0
    %924 = vmatprep.subr.mxu0 0.0
    %925 = vmatpush2.msra.mxu0 0.0
    %926 = vmatprep.subr.mxu0 0.0
    %927 = vmatpush2.msra.mxu0 0.0
    %928 = vmatprep.subr.mxu0 0.0
    %929 = vmatpush2.msra.mxu0 0.0
    %930 = vmatprep.subr.mxu0 0.0
    %931 = vmatpush2.msra.mxu0 0.0
    %932 = vmatprep.subr.mxu0 0.0
    %933 = vmatpush2.msra.mxu0 0.0
    %934 = vmatprep.subr.mxu0 0.0
    %935 = vmatpush2.msra.mxu0 0.0
    %936 = vmatprep.subr.mxu0 0.0
    %937 = vmatpush2.msra.mxu0 0.0
    %938 = vmatprep.subr.mxu0 0.0
    %939 = vmatpush2.msra.mxu0 0.0
    %940 = vmatprep.subr.mxu0 0.0
    %941 = vmatpush2.msra.mxu0 0.0
    %942 = vmatprep.subr.mxu0 0.0
    %943 = vmatpush2.msra.mxu0 0.0
    %944 = vmatprep.subr.mxu0 0.0
    %945 = vmatpush2.msra.mxu0 0.0
    %946 = vmatprep.subr.mxu0 0.0
    %947 = vmatpush2.msra.mxu0 0.0
    %948 = vmatprep.subr.mxu0 0.0
    %949 = vmatpush2.msra.mxu0 0.0
    %950 = vmatprep.subr.mxu0 0.0
    %951 = vmatpush2.msra.mxu0 0.0
    %952 = vmatprep.mubr.f32.mxu0 0.0
    %953 = vmatmul.mubr.f32.gmra.mxu0 %v886
    %v954 = vpop.f32.mrf.mxu0
    %v955 = vadd.f32 0.0, %v954
    %v956 = vpop.f32.mrf.mxu0
    %957 = vdwg.mxu0
    %v958 = vadd.f32 %v880, %v955
    %v959 = vxor.u32 %v958, 2147483648
    %v960 = vmul.f32 %v959, 1.442695
    %v961 = vpow.pop %v960
    %v962 = vadd.f32 %v961, 1.0
    %v963 = vrcp.pop %v962
    %v964 = vmul.f32 1.0, %v963
    %v965 = vmul.f32 %v964, 2.0
    %v966 = vsub.f32 %v965, 1.0
    %v967 = vmul.f32 %v964, %v687
    %969 = vrot.lane.b32.xlu0 %v966, 112
    %v970 = vpop.permute.xlu0 %969
    %v972 = vmul.f32 %v964, %v970
    %974 = vrot.lane.b32.xlu0 %v972, 8
    %v975 = vpop.permute.xlu0 %974
    %v977 = vadd.f32 %v967, %v975
    %v978 = vtanh.pop %v977
    %980 = vrot.lane.b32.xlu0 %v978, 16
    %v981 = vpop.permute.xlu0 %980
    %v983 = vmul.f32 %v964, %v981
    %v984 = vmax.f32 %v983, 0.0
    %v985 = vmul.f32 %v984, %v402
    %987 = vrot.lane.b32.xlu0 %v985, 104
    %v988 = vpop.permute.xlu0 %987
    %v990 = vsel %vm409, %v988, 0.0
    %991 = vadd.xlane.f32.xlu0 %v990
    %v992 = vpop.xlane.xlu0 %991
    %vm993 = vcmp.eq.s32.totalorder %v127, 2
    %v994 = vsel %vm993, %v992, %v704
    %995 = vmatprep.subr.mxu0 0.0
    %996 = vmatpush1.msra.mxu0 0.0
    %997 = vmatprep.subr.mxu0 0.0
    %998 = vmatpush1.msra.mxu0 0.0
    %999 = vmatprep.subr.mxu0 0.0
    %1000 = vmatpush1.msra.mxu0 0.0
    %1001 = vmatprep.subr.mxu0 0.0
    %1002 = vmatpush1.msra.mxu0 0.0
    %1003 = vmatprep.subr.mxu0 0.0
    %1004 = vmatpush1.msra.mxu0 0.0
    %1005 = vmatprep.subr.mxu0 0.0
    %1006 = vmatpush1.msra.mxu0 0.0
    %1007 = vmatprep.subr.mxu0 0.0
    %1008 = vmatpush1.msra.mxu0 0.0
    %1009 = vmatprep.subr.mxu0 0.0
    %1010 = vmatpush1.msra.mxu0 0.0
    %1011 = vmatprep.subr.mxu0 0.0
    %1012 = vmatpush1.msra.mxu0 0.0
    %1013 = vmatprep.subr.mxu0 0.0
    %1014 = vmatpush1.msra.mxu0 0.0
    %1015 = vmatprep.subr.mxu0 0.0
    %1016 = vmatpush1.msra.mxu0 0.0
    %1017 = vmatprep.subr.mxu0 0.0
    %1018 = vmatpush1.msra.mxu0 0.0
    %1019 = vmatprep.subr.mxu0 0.0
    %1020 = vmatpush1.msra.mxu0 0.0
    %1021 = vmatprep.subr.mxu0 0.0
    %1022 = vmatpush1.msra.mxu0 0.0
    %1023 = vmatprep.subr.mxu0 0.0
    %1024 = vmatpush1.msra.mxu0 0.0
    %1025 = vmatprep.subr.mxu0 0.0
    %1026 = vmatpush1.msra.mxu0 %v40
    %1027 = vmatprep.subr.mxu0 0.0
    %1028 = vmatpush2.msra.mxu0 0.0
    %1029 = vmatprep.subr.mxu0 0.0
    %1030 = vmatpush2.msra.mxu0 0.0
    %1031 = vmatprep.subr.mxu0 0.0
    %1032 = vmatpush2.msra.mxu0 0.0
    %1033 = vmatprep.subr.mxu0 0.0
    %1034 = vmatpush2.msra.mxu0 0.0
    %1035 = vmatprep.subr.mxu0 0.0
    %1036 = vmatpush2.msra.mxu0 0.0
    %1037 = vmatprep.subr.mxu0 0.0
    %1038 = vmatpush2.msra.mxu0 0.0
    %1039 = vmatprep.subr.mxu0 0.0
    %1040 = vmatpush2.msra.mxu0 0.0
    %1041 = vmatprep.subr.mxu0 0.0
    %1042 = vmatpush2.msra.mxu0 0.0
    %1043 = vmatprep.subr.mxu0 0.0
    %1044 = vmatpush2.msra.mxu0 0.0
    %1045 = vmatprep.subr.mxu0 0.0
    %1046 = vmatpush2.msra.mxu0 0.0
    %1047 = vmatprep.subr.mxu0 0.0
    %1048 = vmatpush2.msra.mxu0 0.0
    %1049 = vmatprep.subr.mxu0 0.0
    %1050 = vmatpush2.msra.mxu0 0.0
    %1051 = vmatprep.subr.mxu0 0.0
    %1052 = vmatpush2.msra.mxu0 0.0
    %1053 = vmatprep.subr.mxu0 0.0
    %1054 = vmatpush2.msra.mxu0 0.0
    %1055 = vmatprep.subr.mxu0 0.0
    %1056 = vmatpush2.msra.mxu0 0.0
    %1057 = vmatprep.subr.mxu0 0.0
    %1058 = vmatpush2.msra.mxu0 0.0
    %1059 = vmatprep.mubr.f32.mxu0 0.0
    %1060 = vmatmul.mubr.f32.gmra.mxu0 %v811
    %v1061 = vpop.f32.mrf.mxu0
    %v1062 = vadd.f32 0.0, %v1061
    %v1063 = vpop.f32.mrf.mxu0
    %1064 = vdwg.mxu0
    %v1066 = vrot.slane %v1062, 5
    %v1068 = vadd.f32 %v123, %v1066
    %v1069 = vxor.u32 %v1068, 2147483648
    %v1070 = vmul.f32 %v1069, 1.442695
    %v1071 = vpow.pop %v1070
    %v1072 = vadd.f32 %v1071, 1.0
    %v1073 = vrcp.pop %v1072
    %v1074 = vmul.f32 1.0, %v1073
    %v1075 = vmul.f32 %v1074, 2.0
    %v1076 = vsub.f32 %v1075, 1.0
    %v1078 = vrot.slane %v800, 7
    %v1080 = vmul.f32 %v1074, %v1078
    %1082 = vrot.lane.b32.xlu0 %v1076, 112
    %v1083 = vpop.permute.xlu0 %1082
    %v1085 = vmul.f32 %v1074, %v1083
    %1087 = vrot.lane.b32.xlu0 %v1085, 8
    %v1088 = vpop.permute.xlu0 %1087
    %v1090 = vadd.f32 %v1080, %v1088
    %v1091 = vtanh.pop %v1090
    %1093 = vrot.lane.b32.xlu0 %v1091, 16
    %v1094 = vpop.permute.xlu0 %1093
    %v1096 = vmul.f32 %v1074, %v1094
    %v1098 = vrot.slane %v1096, 3
    %1099 = vrot.lane.b32.xlu0 %v1098, 104
    %v1100 = vpop.permute.xlu0 %1099
    %v1101 = vsel %vm128, %v1100, 0
    %1103 = vmatprep.subr.mxu0 0.0
    %1104 = vmatpush1.msra.mxu0 0.0
    %1105 = vmatprep.subr.mxu0 0.0
    %1106 = vmatpush1.msra.mxu0 0.0
    %1107 = vmatprep.subr.mxu0 0.0
    %1108 = vmatpush1.msra.mxu0 0.0
    %1109 = vmatprep.subr.mxu0 0.0
    %1110 = vmatpush1.msra.mxu0 0.0
    %1111 = vmatprep.subr.mxu0 0.0
    %1112 = vmatpush1.msra.mxu0 0.0
    %1113 = vmatprep.subr.mxu0 0.0
    %1114 = vmatpush1.msra.mxu0 0.0
    %1115 = vmatprep.subr.mxu0 0.0
    %1116 = vmatpush1.msra.mxu0 0.0
    %1117 = vmatprep.subr.mxu0 0.0
    %1118 = vmatpush1.msra.mxu0 0.0
    %1119 = vmatprep.subr.mxu0 0.0
    %1120 = vmatpush1.msra.mxu0 0.0
    %1121 = vmatprep.subr.mxu0 0.0
    %1122 = vmatpush1.msra.mxu0 0.0
    %1123 = vmatprep.subr.mxu0 0.0
    %1124 = vmatpush1.msra.mxu0 0.0
    %1125 = vmatprep.subr.mxu0 0.0
    %1126 = vmatpush1.msra.mxu0 0.0
    %1127 = vmatprep.subr.mxu0 0.0
    %1128 = vmatpush1.msra.mxu0 0.0
    %1129 = vmatprep.subr.mxu0 0.0
    %1130 = vmatpush1.msra.mxu0 0.0
    %1131 = vmatprep.subr.mxu0 0.0
    %1132 = vmatpush1.msra.mxu0 0.0
    %1133 = vmatprep.subr.mxu0 0.0
    %1134 = vmatpush1.msra.mxu0 %v41
    %1135 = vmatprep.subr.mxu0 0.0
    %1136 = vmatpush2.msra.mxu0 0.0
    %1137 = vmatprep.subr.mxu0 0.0
    %1138 = vmatpush2.msra.mxu0 0.0
    %1139 = vmatprep.subr.mxu0 0.0
    %1140 = vmatpush2.msra.mxu0 0.0
    %1141 = vmatprep.subr.mxu0 0.0
    %1142 = vmatpush2.msra.mxu0 0.0
    %1143 = vmatprep.subr.mxu0 0.0
    %1144 = vmatpush2.msra.mxu0 0.0
    %1145 = vmatprep.subr.mxu0 0.0
    %1146 = vmatpush2.msra.mxu0 0.0
    %1147 = vmatprep.subr.mxu0 0.0
    %1148 = vmatpush2.msra.mxu0 0.0
    %1149 = vmatprep.subr.mxu0 0.0
    %1150 = vmatpush2.msra.mxu0 0.0
    %1151 = vmatprep.subr.mxu0 0.0
    %1152 = vmatpush2.msra.mxu0 0.0
    %1153 = vmatprep.subr.mxu0 0.0
    %1154 = vmatpush2.msra.mxu0 0.0
    %1155 = vmatprep.subr.mxu0 0.0
    %1156 = vmatpush2.msra.mxu0 0.0
    %1157 = vmatprep.subr.mxu0 0.0
    %1158 = vmatpush2.msra.mxu0 0.0
    %1159 = vmatprep.subr.mxu0 0.0
    %1160 = vmatpush2.msra.mxu0 0.0
    %1161 = vmatprep.subr.mxu0 0.0
    %1162 = vmatpush2.msra.mxu0 0.0
    %1163 = vmatprep.subr.mxu0 0.0
    %1164 = vmatpush2.msra.mxu0 0.0
    %1165 = vmatprep.subr.mxu0 0.0
    %1166 = vmatpush2.msra.mxu0 0.0
    %1167 = vmatprep.mubr.f32.mxu0 0.0
    %1168 = vmatmul.mubr.f32.gmra.mxu0 %v1101
    %v1169 = vpop.f32.mrf.mxu0
    %v1170 = vadd.f32 %v44, %v1169
    %v1171 = vpop.f32.mrf.mxu0
    %1172 = vdwg.mxu0
    %1174 = vrot.lane.b32.xlu0 %v983, 104
    %v1175 = vpop.permute.xlu0 %1174
    %v1176 = vsel %vm128, %v1175, 0
    %1178 = vmatprep.subr.mxu0 0.0
    %1179 = vmatpush1.msra.mxu0 0.0
    %1180 = vmatprep.subr.mxu0 0.0
    %1181 = vmatpush1.msra.mxu0 0.0
    %1182 = vmatprep.subr.mxu0 0.0
    %1183 = vmatpush1.msra.mxu0 0.0
    %1184 = vmatprep.subr.mxu0 0.0
    %1185 = vmatpush1.msra.mxu0 0.0
    %1186 = vmatprep.subr.mxu0 0.0
    %1187 = vmatpush1.msra.mxu0 0.0
    %1188 = vmatprep.subr.mxu0 0.0
    %1189 = vmatpush1.msra.mxu0 0.0
    %1190 = vmatprep.subr.mxu0 0.0
    %1191 = vmatpush1.msra.mxu0 0.0
    %1192 = vmatprep.subr.mxu0 0.0
    %1193 = vmatpush1.msra.mxu0 0.0
    %1194 = vmatprep.subr.mxu0 0.0
    %1195 = vmatpush1.msra.mxu0 0.0
    %1196 = vmatprep.subr.mxu0 0.0
    %1197 = vmatpush1.msra.mxu0 0.0
    %1198 = vmatprep.subr.mxu0 0.0
    %1199 = vmatpush1.msra.mxu0 0.0
    %1200 = vmatprep.subr.mxu0 0.0
    %1201 = vmatpush1.msra.mxu0 0.0
    %1202 = vmatprep.subr.mxu0 0.0
    %1203 = vmatpush1.msra.mxu0 0.0
    %1204 = vmatprep.subr.mxu0 0.0
    %1205 = vmatpush1.msra.mxu0 0.0
    %1206 = vmatprep.subr.mxu0 0.0
    %1207 = vmatpush1.msra.mxu0 0.0
    %1208 = vmatprep.subr.mxu0 0.0
    %1209 = vmatpush1.msra.mxu0 %v42
    %1210 = vmatprep.subr.mxu0 0.0
    %1211 = vmatpush2.msra.mxu0 0.0
    %1212 = vmatprep.subr.mxu0 0.0
    %1213 = vmatpush2.msra.mxu0 0.0
    %1214 = vmatprep.subr.mxu0 0.0
    %1215 = vmatpush2.msra.mxu0 0.0
    %1216 = vmatprep.subr.mxu0 0.0
    %1217 = vmatpush2.msra.mxu0 0.0
    %1218 = vmatprep.subr.mxu0 0.0
    %1219 = vmatpush2.msra.mxu0 0.0
    %1220 = vmatprep.subr.mxu0 0.0
    %1221 = vmatpush2.msra.mxu0 0.0
    %1222 = vmatprep.subr.mxu0 0.0
    %1223 = vmatpush2.msra.mxu0 0.0
    %1224 = vmatprep.subr.mxu0 0.0
    %1225 = vmatpush2.msra.mxu0 0.0
    %1226 = vmatprep.subr.mxu0 0.0
    %1227 = vmatpush2.msra.mxu0 0.0
    %1228 = vmatprep.subr.mxu0 0.0
    %1229 = vmatpush2.msra.mxu0 0.0
    %1230 = vmatprep.subr.mxu0 0.0
    %1231 = vmatpush2.msra.mxu0 0.0
    %1232 = vmatprep.subr.mxu0 0.0
    %1233 = vmatpush2.msra.mxu0 0.0
    %1234 = vmatprep.subr.mxu0 0.0
    %1235 = vmatpush2.msra.mxu0 0.0
    %1236 = vmatprep.subr.mxu0 0.0
    %1237 = vmatpush2.msra.mxu0 0.0
    %1238 = vmatprep.subr.mxu0 0.0
    %1239 = vmatpush2.msra.mxu0 0.0
    %1240 = vmatprep.subr.mxu0 0.0
    %1241 = vmatpush2.msra.mxu0 0.0
    %1242 = vmatprep.mubr.f32.mxu0 0.0
    %1243 = vmatmul.mubr.f32.gmra.mxu0 %v1176
    %v1244 = vpop.f32.mrf.mxu0
    %v1245 = vadd.f32 0.0, %v1244
    %v1246 = vpop.f32.mrf.mxu0
    %1247 = vdwg.mxu0
    %v1248 = vadd.f32 %v1170, %v1245
    %v1249 = vxor.u32 %v1248, 2147483648
    %v1250 = vmul.f32 %v1249, 1.442695
    %v1251 = vpow.pop %v1250
    %v1252 = vadd.f32 %v1251, 1.0
    %v1253 = vrcp.pop %v1252
    %v1254 = vmul.f32 1.0, %v1253
    %v1255 = vmul.f32 %v1254, 2.0
    %v1256 = vsub.f32 %v1255, 1.0
    %v1257 = vmul.f32 %v1254, %v977
    %1259 = vrot.lane.b32.xlu0 %v1256, 112
    %v1260 = vpop.permute.xlu0 %1259
    %v1262 = vmul.f32 %v1254, %v1260
    %1264 = vrot.lane.b32.xlu0 %v1262, 8
    %v1265 = vpop.permute.xlu0 %1264
    %v1267 = vadd.f32 %v1257, %v1265
    %v1268 = vtanh.pop %v1267
    %1270 = vrot.lane.b32.xlu0 %v1268, 16
    %v1271 = vpop.permute.xlu0 %1270
    %v1273 = vmul.f32 %v1254, %v1271
    %v1274 = vmax.f32 %v1273, 0.0
    %v1275 = vmul.f32 %v1274, %v402
    %1277 = vrot.lane.b32.xlu0 %v1275, 104
    %v1278 = vpop.permute.xlu0 %1277
    %v1280 = vsel %vm409, %v1278, 0.0
    %1281 = vadd.xlane.f32.xlu0 %v1280
    %v1282 = vpop.xlane.xlu0 %1281
    %vm1283 = vcmp.eq.s32.totalorder %v127, 3
    %v1284 = vsel %vm1283, %v1282, %v994
    %1285 = vmatprep.subr.mxu0 0.0
    %1286 = vmatpush1.msra.mxu0 0.0
    %1287 = vmatprep.subr.mxu0 0.0
    %1288 = vmatpush1.msra.mxu0 0.0
    %1289 = vmatprep.subr.mxu0 0.0
    %1290 = vmatpush1.msra.mxu0 0.0
    %1291 = vmatprep.subr.mxu0 0.0
    %1292 = vmatpush1.msra.mxu0 0.0
    %1293 = vmatprep.subr.mxu0 0.0
    %1294 = vmatpush1.msra.mxu0 0.0
    %1295 = vmatprep.subr.mxu0 0.0
    %1296 = vmatpush1.msra.mxu0 0.0
    %1297 = vmatprep.subr.mxu0 0.0
    %1298 = vmatpush1.msra.mxu0 0.0
    %1299 = vmatprep.subr.mxu0 0.0
    %1300 = vmatpush1.msra.mxu0 0.0
    %1301 = vmatprep.subr.mxu0 0.0
    %1302 = vmatpush1.msra.mxu0 0.0
    %1303 = vmatprep.subr.mxu0 0.0
    %1304 = vmatpush1.msra.mxu0 0.0
    %1305 = vmatprep.subr.mxu0 0.0
    %1306 = vmatpush1.msra.mxu0 0.0
    %1307 = vmatprep.subr.mxu0 0.0
    %1308 = vmatpush1.msra.mxu0 0.0
    %1309 = vmatprep.subr.mxu0 0.0
    %1310 = vmatpush1.msra.mxu0 0.0
    %1311 = vmatprep.subr.mxu0 0.0
    %1312 = vmatpush1.msra.mxu0 0.0
    %1313 = vmatprep.subr.mxu0 0.0
    %1314 = vmatpush1.msra.mxu0 0.0
    %1315 = vmatprep.subr.mxu0 0.0
    %1316 = vmatpush1.msra.mxu0 %v40
    %1317 = vmatprep.subr.mxu0 0.0
    %1318 = vmatpush2.msra.mxu0 0.0
    %1319 = vmatprep.subr.mxu0 0.0
    %1320 = vmatpush2.msra.mxu0 0.0
    %1321 = vmatprep.subr.mxu0 0.0
    %1322 = vmatpush2.msra.mxu0 0.0
    %1323 = vmatprep.subr.mxu0 0.0
    %1324 = vmatpush2.msra.mxu0 0.0
    %1325 = vmatprep.subr.mxu0 0.0
    %1326 = vmatpush2.msra.mxu0 0.0
    %1327 = vmatprep.subr.mxu0 0.0
    %1328 = vmatpush2.msra.mxu0 0.0
    %1329 = vmatprep.subr.mxu0 0.0
    %1330 = vmatpush2.msra.mxu0 0.0
    %1331 = vmatprep.subr.mxu0 0.0
    %1332 = vmatpush2.msra.mxu0 0.0
    %1333 = vmatprep.subr.mxu0 0.0
    %1334 = vmatpush2.msra.mxu0 0.0
    %1335 = vmatprep.subr.mxu0 0.0
    %1336 = vmatpush2.msra.mxu0 0.0
    %1337 = vmatprep.subr.mxu0 0.0
    %1338 = vmatpush2.msra.mxu0 0.0
    %1339 = vmatprep.subr.mxu0 0.0
    %1340 = vmatpush2.msra.mxu0 0.0
    %1341 = vmatprep.subr.mxu0 0.0
    %1342 = vmatpush2.msra.mxu0 0.0
    %1343 = vmatprep.subr.mxu0 0.0
    %1344 = vmatpush2.msra.mxu0 0.0
    %1345 = vmatprep.subr.mxu0 0.0
    %1346 = vmatpush2.msra.mxu0 0.0
    %1347 = vmatprep.subr.mxu0 0.0
    %1348 = vmatpush2.msra.mxu0 0.0
    %1349 = vmatprep.mubr.f32.mxu0 0.0
    %1350 = vmatmul.mubr.f32.gmra.mxu0 %v1101
    %v1351 = vpop.f32.mrf.mxu0
    %v1352 = vadd.f32 0.0, %v1351
    %v1353 = vpop.f32.mrf.mxu0
    %1354 = vdwg.mxu0
    %v1356 = vrot.slane %v1352, 4
    %v1358 = vadd.f32 %v123, %v1356
    %v1359 = vxor.u32 %v1358, 2147483648
    %v1360 = vmul.f32 %v1359, 1.442695
    %v1361 = vpow.pop %v1360
    %v1362 = vadd.f32 %v1361, 1.0
    %v1363 = vrcp.pop %v1362
    %v1364 = vmul.f32 1.0, %v1363
    %v1365 = vmul.f32 %v1364, 2.0
    %v1366 = vsub.f32 %v1365, 1.0
    %v1368 = vrot.slane %v1090, 7
    %v1370 = vmul.f32 %v1364, %v1368
    %1372 = vrot.lane.b32.xlu0 %v1366, 112
    %v1373 = vpop.permute.xlu0 %1372
    %v1375 = vmul.f32 %v1364, %v1373
    %1377 = vrot.lane.b32.xlu0 %v1375, 8
    %v1378 = vpop.permute.xlu0 %1377
    %v1380 = vadd.f32 %v1370, %v1378
    %v1381 = vtanh.pop %v1380
    %1383 = vrot.lane.b32.xlu0 %v1381, 16
    %v1384 = vpop.permute.xlu0 %1383
    %v1386 = vmul.f32 %v1364, %v1384
    %v1388 = vrot.slane %v1386, 4
    %1389 = vrot.lane.b32.xlu0 %v1388, 104
    %v1390 = vpop.permute.xlu0 %1389
    %v1391 = vsel %vm128, %v1390, 0
    %1393 = vmatprep.subr.mxu0 0.0
    %1394 = vmatpush1.msra.mxu0 0.0
    %1395 = vmatprep.subr.mxu0 0.0
    %1396 = vmatpush1.msra.mxu0 0.0
    %1397 = vmatprep.subr.mxu0 0.0
    %1398 = vmatpush1.msra.mxu0 0.0
    %1399 = vmatprep.subr.mxu0 0.0
    %1400 = vmatpush1.msra.mxu0 0.0
    %1401 = vmatprep.subr.mxu0 0.0
    %1402 = vmatpush1.msra.mxu0 0.0
    %1403 = vmatprep.subr.mxu0 0.0
    %1404 = vmatpush1.msra.mxu0 0.0
    %1405 = vmatprep.subr.mxu0 0.0
    %1406 = vmatpush1.msra.mxu0 0.0
    %1407 = vmatprep.subr.mxu0 0.0
    %1408 = vmatpush1.msra.mxu0 0.0
    %1409 = vmatprep.subr.mxu0 0.0
    %1410 = vmatpush1.msra.mxu0 0.0
    %1411 = vmatprep.subr.mxu0 0.0
    %1412 = vmatpush1.msra.mxu0 0.0
    %1413 = vmatprep.subr.mxu0 0.0
    %1414 = vmatpush1.msra.mxu0 0.0
    %1415 = vmatprep.subr.mxu0 0.0
    %1416 = vmatpush1.msra.mxu0 0.0
    %1417 = vmatprep.subr.mxu0 0.0
    %1418 = vmatpush1.msra.mxu0 0.0
    %1419 = vmatprep.subr.mxu0 0.0
    %1420 = vmatpush1.msra.mxu0 0.0
    %1421 = vmatprep.subr.mxu0 0.0
    %1422 = vmatpush1.msra.mxu0 0.0
    %1423 = vmatprep.subr.mxu0 0.0
    %1424 = vmatpush1.msra.mxu0 %v41
    %1425 = vmatprep.subr.mxu0 0.0
    %1426 = vmatpush2.msra.mxu0 0.0
    %1427 = vmatprep.subr.mxu0 0.0
    %1428 = vmatpush2.msra.mxu0 0.0
    %1429 = vmatprep.subr.mxu0 0.0
    %1430 = vmatpush2.msra.mxu0 0.0
    %1431 = vmatprep.subr.mxu0 0.0
    %1432 = vmatpush2.msra.mxu0 0.0
    %1433 = vmatprep.subr.mxu0 0.0
    %1434 = vmatpush2.msra.mxu0 0.0
    %1435 = vmatprep.subr.mxu0 0.0
    %1436 = vmatpush2.msra.mxu0 0.0
    %1437 = vmatprep.subr.mxu0 0.0
    %1438 = vmatpush2.msra.mxu0 0.0
    %1439 = vmatprep.subr.mxu0 0.0
    %1440 = vmatpush2.msra.mxu0 0.0
    %1441 = vmatprep.subr.mxu0 0.0
    %1442 = vmatpush2.msra.mxu0 0.0
    %1443 = vmatprep.subr.mxu0 0.0
    %1444 = vmatpush2.msra.mxu0 0.0
    %1445 = vmatprep.subr.mxu0 0.0
    %1446 = vmatpush2.msra.mxu0 0.0
    %1447 = vmatprep.subr.mxu0 0.0
    %1448 = vmatpush2.msra.mxu0 0.0
    %1449 = vmatprep.subr.mxu0 0.0
    %1450 = vmatpush2.msra.mxu0 0.0
    %1451 = vmatprep.subr.mxu0 0.0
    %1452 = vmatpush2.msra.mxu0 0.0
    %1453 = vmatprep.subr.mxu0 0.0
    %1454 = vmatpush2.msra.mxu0 0.0
    %1455 = vmatprep.subr.mxu0 0.0
    %1456 = vmatpush2.msra.mxu0 0.0
    %1457 = vmatprep.mubr.f32.mxu0 0.0
    %1458 = vmatmul.mubr.f32.gmra.mxu0 %v1391
    %v1459 = vpop.f32.mrf.mxu0
    %v1460 = vadd.f32 %v44, %v1459
    %v1461 = vpop.f32.mrf.mxu0
    %1462 = vdwg.mxu0
    %1464 = vrot.lane.b32.xlu0 %v1273, 104
    %v1465 = vpop.permute.xlu0 %1464
    %v1466 = vsel %vm128, %v1465, 0
    %1468 = vmatprep.subr.mxu0 0.0
    %1469 = vmatpush1.msra.mxu0 0.0
    %1470 = vmatprep.subr.mxu0 0.0
    %1471 = vmatpush1.msra.mxu0 0.0
    %1472 = vmatprep.subr.mxu0 0.0
    %1473 = vmatpush1.msra.mxu0 0.0
    %1474 = vmatprep.subr.mxu0 0.0
    %1475 = vmatpush1.msra.mxu0 0.0
    %1476 = vmatprep.subr.mxu0 0.0
    %1477 = vmatpush1.msra.mxu0 0.0
    %1478 = vmatprep.subr.mxu0 0.0
    %1479 = vmatpush1.msra.mxu0 0.0
    %1480 = vmatprep.subr.mxu0 0.0
    %1481 = vmatpush1.msra.mxu0 0.0
    %1482 = vmatprep.subr.mxu0 0.0
    %1483 = vmatpush1.msra.mxu0 0.0
    %1484 = vmatprep.subr.mxu0 0.0
    %1485 = vmatpush1.msra.mxu0 0.0
    %1486 = vmatprep.subr.mxu0 0.0
    %1487 = vmatpush1.msra.mxu0 0.0
    %1488 = vmatprep.subr.mxu0 0.0
    %1489 = vmatpush1.msra.mxu0 0.0
    %1490 = vmatprep.subr.mxu0 0.0
    %1491 = vmatpush1.msra.mxu0 0.0
    %1492 = vmatprep.subr.mxu0 0.0
    %1493 = vmatpush1.msra.mxu0 0.0
    %1494 = vmatprep.subr.mxu0 0.0
    %1495 = vmatpush1.msra.mxu0 0.0
    %1496 = vmatprep.subr.mxu0 0.0
    %1497 = vmatpush1.msra.mxu0 0.0
    %1498 = vmatprep.subr.mxu0 0.0
    %1499 = vmatpush1.msra.mxu0 %v42
    %1500 = vmatprep.subr.mxu0 0.0
    %1501 = vmatpush2.msra.mxu0 0.0
    %1502 = vmatprep.subr.mxu0 0.0
    %1503 = vmatpush2.msra.mxu0 0.0
    %1504 = vmatprep.subr.mxu0 0.0
    %1505 = vmatpush2.msra.mxu0 0.0
    %1506 = vmatprep.subr.mxu0 0.0
    %1507 = vmatpush2.msra.mxu0 0.0
    %1508 = vmatprep.subr.mxu0 0.0
    %1509 = vmatpush2.msra.mxu0 0.0
    %1510 = vmatprep.subr.mxu0 0.0
    %1511 = vmatpush2.msra.mxu0 0.0
    %1512 = vmatprep.subr.mxu0 0.0
    %1513 = vmatpush2.msra.mxu0 0.0
    %1514 = vmatprep.subr.mxu0 0.0
    %1515 = vmatpush2.msra.mxu0 0.0
    %1516 = vmatprep.subr.mxu0 0.0
    %1517 = vmatpush2.msra.mxu0 0.0
    %1518 = vmatprep.subr.mxu0 0.0
    %1519 = vmatpush2.msra.mxu0 0.0
    %1520 = vmatprep.subr.mxu0 0.0
    %1521 = vmatpush2.msra.mxu0 0.0
    %1522 = vmatprep.subr.mxu0 0.0
    %1523 = vmatpush2.msra.mxu0 0.0
    %1524 = vmatprep.subr.mxu0 0.0
    %1525 = vmatpush2.msra.mxu0 0.0
    %1526 = vmatprep.subr.mxu0 0.0
    %1527 = vmatpush2.msra.mxu0 0.0
    %1528 = vmatprep.subr.mxu0 0.0
    %1529 = vmatpush2.msra.mxu0 0.0
    %1530 = vmatprep.subr.mxu0 0.0
    %1531 = vmatpush2.msra.mxu0 0.0
    %1532 = vmatprep.mubr.f32.mxu0 0.0
    %1533 = vmatmul.mubr.f32.gmra.mxu0 %v1466
    %v1534 = vpop.f32.mrf.mxu0
    %v1535 = vadd.f32 0.0, %v1534
    %v1536 = vpop.f32.mrf.mxu0
    %1537 = vdwg.mxu0
    %v1538 = vadd.f32 %v1460, %v1535
    %v1539 = vxor.u32 %v1538, 2147483648
    %v1540 = vmul.f32 %v1539, 1.442695
    %v1541 = vpow.pop %v1540
    %v1542 = vadd.f32 %v1541, 1.0
    %v1543 = vrcp.pop %v1542
    %v1544 = vmul.f32 1.0, %v1543
    %v1545 = vmul.f32 %v1544, 2.0
    %v1546 = vsub.f32 %v1545, 1.0
    %v1547 = vmul.f32 %v1544, %v1267
    %1549 = vrot.lane.b32.xlu0 %v1546, 112
    %v1550 = vpop.permute.xlu0 %1549
    %v1552 = vmul.f32 %v1544, %v1550
    %1554 = vrot.lane.b32.xlu0 %v1552, 8
    %v1555 = vpop.permute.xlu0 %1554
    %v1557 = vadd.f32 %v1547, %v1555
    %v1558 = vtanh.pop %v1557
    %1560 = vrot.lane.b32.xlu0 %v1558, 16
    %v1561 = vpop.permute.xlu0 %1560
    %v1563 = vmul.f32 %v1544, %v1561
    %v1564 = vmax.f32 %v1563, 0.0
    %v1565 = vmul.f32 %v1564, %v402
    %1567 = vrot.lane.b32.xlu0 %v1565, 104
    %v1568 = vpop.permute.xlu0 %1567
    %v1570 = vsel %vm409, %v1568, 0.0
    %1571 = vadd.xlane.f32.xlu0 %v1570
    %v1572 = vpop.xlane.xlu0 %1571
    %vm1573 = vcmp.eq.s32.totalorder %v127, 4
    %v1574 = vsel %vm1573, %v1572, %v1284
    %1575 = vmatprep.subr.mxu0 0.0
    %1576 = vmatpush1.msra.mxu0 0.0
    %1577 = vmatprep.subr.mxu0 0.0
    %1578 = vmatpush1.msra.mxu0 0.0
    %1579 = vmatprep.subr.mxu0 0.0
    %1580 = vmatpush1.msra.mxu0 0.0
    %1581 = vmatprep.subr.mxu0 0.0
    %1582 = vmatpush1.msra.mxu0 0.0
    %1583 = vmatprep.subr.mxu0 0.0
    %1584 = vmatpush1.msra.mxu0 0.0
    %1585 = vmatprep.subr.mxu0 0.0
    %1586 = vmatpush1.msra.mxu0 0.0
    %1587 = vmatprep.subr.mxu0 0.0
    %1588 = vmatpush1.msra.mxu0 0.0
    %1589 = vmatprep.subr.mxu0 0.0
    %1590 = vmatpush1.msra.mxu0 0.0
    %1591 = vmatprep.subr.mxu0 0.0
    %1592 = vmatpush1.msra.mxu0 0.0
    %1593 = vmatprep.subr.mxu0 0.0
    %1594 = vmatpush1.msra.mxu0 0.0
    %1595 = vmatprep.subr.mxu0 0.0
    %1596 = vmatpush1.msra.mxu0 0.0
    %1597 = vmatprep.subr.mxu0 0.0
    %1598 = vmatpush1.msra.mxu0 0.0
    %1599 = vmatprep.subr.mxu0 0.0
    %1600 = vmatpush1.msra.mxu0 0.0
    %1601 = vmatprep.subr.mxu0 0.0
    %1602 = vmatpush1.msra.mxu0 0.0
    %1603 = vmatprep.subr.mxu0 0.0
    %1604 = vmatpush1.msra.mxu0 0.0
    %1605 = vmatprep.subr.mxu0 0.0
    %1606 = vmatpush1.msra.mxu0 %v40
    %1607 = vmatprep.subr.mxu0 0.0
    %1608 = vmatpush2.msra.mxu0 0.0
    %1609 = vmatprep.subr.mxu0 0.0
    %1610 = vmatpush2.msra.mxu0 0.0
    %1611 = vmatprep.subr.mxu0 0.0
    %1612 = vmatpush2.msra.mxu0 0.0
    %1613 = vmatprep.subr.mxu0 0.0
    %1614 = vmatpush2.msra.mxu0 0.0
    %1615 = vmatprep.subr.mxu0 0.0
    %1616 = vmatpush2.msra.mxu0 0.0
    %1617 = vmatprep.subr.mxu0 0.0
    %1618 = vmatpush2.msra.mxu0 0.0
    %1619 = vmatprep.subr.mxu0 0.0
    %1620 = vmatpush2.msra.mxu0 0.0
    %1621 = vmatprep.subr.mxu0 0.0
    %1622 = vmatpush2.msra.mxu0 0.0
    %1623 = vmatprep.subr.mxu0 0.0
    %1624 = vmatpush2.msra.mxu0 0.0
    %1625 = vmatprep.subr.mxu0 0.0
    %1626 = vmatpush2.msra.mxu0 0.0
    %1627 = vmatprep.subr.mxu0 0.0
    %1628 = vmatpush2.msra.mxu0 0.0
    %1629 = vmatprep.subr.mxu0 0.0
    %1630 = vmatpush2.msra.mxu0 0.0
    %1631 = vmatprep.subr.mxu0 0.0
    %1632 = vmatpush2.msra.mxu0 0.0
    %1633 = vmatprep.subr.mxu0 0.0
    %1634 = vmatpush2.msra.mxu0 0.0
    %1635 = vmatprep.subr.mxu0 0.0
    %1636 = vmatpush2.msra.mxu0 0.0
    %1637 = vmatprep.subr.mxu0 0.0
    %1638 = vmatpush2.msra.mxu0 0.0
    %1639 = vmatprep.mubr.f32.mxu0 0.0
    %1640 = vmatmul.mubr.f32.gmra.mxu0 %v1391
    %v1641 = vpop.f32.mrf.mxu0
    %v1642 = vadd.f32 0.0, %v1641
    %v1643 = vpop.f32.mrf.mxu0
    %1644 = vdwg.mxu0
    %v1646 = vrot.slane %v1642, 3
    %v1648 = vadd.f32 %v123, %v1646
    %v1649 = vxor.u32 %v1648, 2147483648
    %v1650 = vmul.f32 %v1649, 1.442695
    %v1651 = vpow.pop %v1650
    %v1652 = vadd.f32 %v1651, 1.0
    %v1653 = vrcp.pop %v1652
    %v1654 = vmul.f32 1.0, %v1653
    %v1655 = vmul.f32 %v1654, 2.0
    %v1656 = vsub.f32 %v1655, 1.0
    %v1658 = vrot.slane %v1380, 7
    %v1660 = vmul.f32 %v1654, %v1658
    %1662 = vrot.lane.b32.xlu0 %v1656, 112
    %v1663 = vpop.permute.xlu0 %1662
    %v1665 = vmul.f32 %v1654, %v1663
    %1667 = vrot.lane.b32.xlu0 %v1665, 8
    %v1668 = vpop.permute.xlu0 %1667
    %v1670 = vadd.f32 %v1660, %v1668
    %v1671 = vtanh.pop %v1670
    %1673 = vrot.lane.b32.xlu0 %v1671, 16
    %v1674 = vpop.permute.xlu0 %1673
    %v1676 = vmul.f32 %v1654, %v1674
    %v1678 = vrot.slane %v1676, 5
    %1679 = vrot.lane.b32.xlu0 %v1678, 104
    %v1680 = vpop.permute.xlu0 %1679
    %v1681 = vsel %vm128, %v1680, 0
    %1683 = vmatprep.subr.mxu0 0.0
    %1684 = vmatpush1.msra.mxu0 0.0
    %1685 = vmatprep.subr.mxu0 0.0
    %1686 = vmatpush1.msra.mxu0 0.0
    %1687 = vmatprep.subr.mxu0 0.0
    %1688 = vmatpush1.msra.mxu0 0.0
    %1689 = vmatprep.subr.mxu0 0.0
    %1690 = vmatpush1.msra.mxu0 0.0
    %1691 = vmatprep.subr.mxu0 0.0
    %1692 = vmatpush1.msra.mxu0 0.0
    %1693 = vmatprep.subr.mxu0 0.0
    %1694 = vmatpush1.msra.mxu0 0.0
    %1695 = vmatprep.subr.mxu0 0.0
    %1696 = vmatpush1.msra.mxu0 0.0
    %1697 = vmatprep.subr.mxu0 0.0
    %1698 = vmatpush1.msra.mxu0 0.0
    %1699 = vmatprep.subr.mxu0 0.0
    %1700 = vmatpush1.msra.mxu0 0.0
    %1701 = vmatprep.subr.mxu0 0.0
    %1702 = vmatpush1.msra.mxu0 0.0
    %1703 = vmatprep.subr.mxu0 0.0
    %1704 = vmatpush1.msra.mxu0 0.0
    %1705 = vmatprep.subr.mxu0 0.0
    %1706 = vmatpush1.msra.mxu0 0.0
    %1707 = vmatprep.subr.mxu0 0.0
    %1708 = vmatpush1.msra.mxu0 0.0
    %1709 = vmatprep.subr.mxu0 0.0
    %1710 = vmatpush1.msra.mxu0 0.0
    %1711 = vmatprep.subr.mxu0 0.0
    %1712 = vmatpush1.msra.mxu0 0.0
    %1713 = vmatprep.subr.mxu0 0.0
    %1714 = vmatpush1.msra.mxu0 %v41
    %1715 = vmatprep.subr.mxu0 0.0
    %1716 = vmatpush2.msra.mxu0 0.0
    %1717 = vmatprep.subr.mxu0 0.0
    %1718 = vmatpush2.msra.mxu0 0.0
    %1719 = vmatprep.subr.mxu0 0.0
    %1720 = vmatpush2.msra.mxu0 0.0
    %1721 = vmatprep.subr.mxu0 0.0
    %1722 = vmatpush2.msra.mxu0 0.0
    %1723 = vmatprep.subr.mxu0 0.0
    %1724 = vmatpush2.msra.mxu0 0.0
    %1725 = vmatprep.subr.mxu0 0.0
    %1726 = vmatpush2.msra.mxu0 0.0
    %1727 = vmatprep.subr.mxu0 0.0
    %1728 = vmatpush2.msra.mxu0 0.0
    %1729 = vmatprep.subr.mxu0 0.0
    %1730 = vmatpush2.msra.mxu0 0.0
    %1731 = vmatprep.subr.mxu0 0.0
    %1732 = vmatpush2.msra.mxu0 0.0
    %1733 = vmatprep.subr.mxu0 0.0
    %1734 = vmatpush2.msra.mxu0 0.0
    %1735 = vmatprep.subr.mxu0 0.0
    %1736 = vmatpush2.msra.mxu0 0.0
    %1737 = vmatprep.subr.mxu0 0.0
    %1738 = vmatpush2.msra.mxu0 0.0
    %1739 = vmatprep.subr.mxu0 0.0
    %1740 = vmatpush2.msra.mxu0 0.0
    %1741 = vmatprep.subr.mxu0 0.0
    %1742 = vmatpush2.msra.mxu0 0.0
    %1743 = vmatprep.subr.mxu0 0.0
    %1744 = vmatpush2.msra.mxu0 0.0
    %1745 = vmatprep.subr.mxu0 0.0
    %1746 = vmatpush2.msra.mxu0 0.0
    %1747 = vmatprep.mubr.f32.mxu0 0.0
    %1748 = vmatmul.mubr.f32.gmra.mxu0 %v1681
    %v1749 = vpop.f32.mrf.mxu0
    %v1750 = vadd.f32 %v44, %v1749
    %v1751 = vpop.f32.mrf.mxu0
    %1752 = vdwg.mxu0
    %1754 = vrot.lane.b32.xlu0 %v1563, 104
    %v1755 = vpop.permute.xlu0 %1754
    %v1756 = vsel %vm128, %v1755, 0
    %1758 = vmatprep.subr.mxu0 0.0
    %1759 = vmatpush1.msra.mxu0 0.0
    %1760 = vmatprep.subr.mxu0 0.0
    %1761 = vmatpush1.msra.mxu0 0.0
    %1762 = vmatprep.subr.mxu0 0.0
    %1763 = vmatpush1.msra.mxu0 0.0
    %1764 = vmatprep.subr.mxu0 0.0
    %1765 = vmatpush1.msra.mxu0 0.0
    %1766 = vmatprep.subr.mxu0 0.0
    %1767 = vmatpush1.msra.mxu0 0.0
    %1768 = vmatprep.subr.mxu0 0.0
    %1769 = vmatpush1.msra.mxu0 0.0
    %1770 = vmatprep.subr.mxu0 0.0
    %1771 = vmatpush1.msra.mxu0 0.0
    %1772 = vmatprep.subr.mxu0 0.0
    %1773 = vmatpush1.msra.mxu0 0.0
    %1774 = vmatprep.subr.mxu0 0.0
    %1775 = vmatpush1.msra.mxu0 0.0
    %1776 = vmatprep.subr.mxu0 0.0
    %1777 = vmatpush1.msra.mxu0 0.0
    %1778 = vmatprep.subr.mxu0 0.0
    %1779 = vmatpush1.msra.mxu0 0.0
    %1780 = vmatprep.subr.mxu0 0.0
    %1781 = vmatpush1.msra.mxu0 0.0
    %1782 = vmatprep.subr.mxu0 0.0
    %1783 = vmatpush1.msra.mxu0 0.0
    %1784 = vmatprep.subr.mxu0 0.0
    %1785 = vmatpush1.msra.mxu0 0.0
    %1786 = vmatprep.subr.mxu0 0.0
    %1787 = vmatpush1.msra.mxu0 0.0
    %1788 = vmatprep.subr.mxu0 0.0
    %1789 = vmatpush1.msra.mxu0 %v42
    %1790 = vmatprep.subr.mxu0 0.0
    %1791 = vmatpush2.msra.mxu0 0.0
    %1792 = vmatprep.subr.mxu0 0.0
    %1793 = vmatpush2.msra.mxu0 0.0
    %1794 = vmatprep.subr.mxu0 0.0
    %1795 = vmatpush2.msra.mxu0 0.0
    %1796 = vmatprep.subr.mxu0 0.0
    %1797 = vmatpush2.msra.mxu0 0.0
    %1798 = vmatprep.subr.mxu0 0.0
    %1799 = vmatpush2.msra.mxu0 0.0
    %1800 = vmatprep.subr.mxu0 0.0
    %1801 = vmatpush2.msra.mxu0 0.0
    %1802 = vmatprep.subr.mxu0 0.0
    %1803 = vmatpush2.msra.mxu0 0.0
    %1804 = vmatprep.subr.mxu0 0.0
    %1805 = vmatpush2.msra.mxu0 0.0
    %1806 = vmatprep.subr.mxu0 0.0
    %1807 = vmatpush2.msra.mxu0 0.0
    %1808 = vmatprep.subr.mxu0 0.0
    %1809 = vmatpush2.msra.mxu0 0.0
    %1810 = vmatprep.subr.mxu0 0.0
    %1811 = vmatpush2.msra.mxu0 0.0
    %1812 = vmatprep.subr.mxu0 0.0
    %1813 = vmatpush2.msra.mxu0 0.0
    %1814 = vmatprep.subr.mxu0 0.0
    %1815 = vmatpush2.msra.mxu0 0.0
    %1816 = vmatprep.subr.mxu0 0.0
    %1817 = vmatpush2.msra.mxu0 0.0
    %1818 = vmatprep.subr.mxu0 0.0
    %1819 = vmatpush2.msra.mxu0 0.0
    %1820 = vmatprep.subr.mxu0 0.0
    %1821 = vmatpush2.msra.mxu0 0.0
    %1822 = vmatprep.mubr.f32.mxu0 0.0
    %1823 = vmatmul.mubr.f32.gmra.mxu0 %v1756
    %v1824 = vpop.f32.mrf.mxu0
    %v1825 = vadd.f32 0.0, %v1824
    %v1826 = vpop.f32.mrf.mxu0
    %1827 = vdwg.mxu0
    %v1828 = vadd.f32 %v1750, %v1825
    %v1829 = vxor.u32 %v1828, 2147483648
    %v1830 = vmul.f32 %v1829, 1.442695
    %v1831 = vpow.pop %v1830
    %v1832 = vadd.f32 %v1831, 1.0
    %v1833 = vrcp.pop %v1832
    %v1834 = vmul.f32 1.0, %v1833
    %v1835 = vmul.f32 %v1834, 2.0
    %v1836 = vsub.f32 %v1835, 1.0
    %v1837 = vmul.f32 %v1834, %v1557
    %1839 = vrot.lane.b32.xlu0 %v1836, 112
    %v1840 = vpop.permute.xlu0 %1839
    %v1842 = vmul.f32 %v1834, %v1840
    %1844 = vrot.lane.b32.xlu0 %v1842, 8
    %v1845 = vpop.permute.xlu0 %1844
    %v1847 = vadd.f32 %v1837, %v1845
    %v1848 = vtanh.pop %v1847
    %1850 = vrot.lane.b32.xlu0 %v1848, 16
    %v1851 = vpop.permute.xlu0 %1850
    %v1853 = vmul.f32 %v1834, %v1851
    %v1854 = vmax.f32 %v1853, 0.0
    %v1855 = vmul.f32 %v1854, %v402
    %1857 = vrot.lane.b32.xlu0 %v1855, 104
    %v1858 = vpop.permute.xlu0 %1857
    %v1860 = vsel %vm409, %v1858, 0.0
    %1861 = vadd.xlane.f32.xlu0 %v1860
    %v1862 = vpop.xlane.xlu0 %1861
    %vm1863 = vcmp.eq.s32.totalorder %v127, 5
    %v1864 = vsel %vm1863, %v1862, %v1574
    %1865 = vmatprep.subr.mxu0 0.0
    %1866 = vmatpush1.msra.mxu0 0.0
    %1867 = vmatprep.subr.mxu0 0.0
    %1868 = vmatpush1.msra.mxu0 0.0
    %1869 = vmatprep.subr.mxu0 0.0
    %1870 = vmatpush1.msra.mxu0 0.0
    %1871 = vmatprep.subr.mxu0 0.0
    %1872 = vmatpush1.msra.mxu0 0.0
    %1873 = vmatprep.subr.mxu0 0.0
    %1874 = vmatpush1.msra.mxu0 0.0
    %1875 = vmatprep.subr.mxu0 0.0
    %1876 = vmatpush1.msra.mxu0 0.0
    %1877 = vmatprep.subr.mxu0 0.0
    %1878 = vmatpush1.msra.mxu0 0.0
    %1879 = vmatprep.subr.mxu0 0.0
    %1880 = vmatpush1.msra.mxu0 0.0
    %1881 = vmatprep.subr.mxu0 0.0
    %1882 = vmatpush1.msra.mxu0 0.0
    %1883 = vmatprep.subr.mxu0 0.0
    %1884 = vmatpush1.msra.mxu0 0.0
    %1885 = vmatprep.subr.mxu0 0.0
    %1886 = vmatpush1.msra.mxu0 0.0
    %1887 = vmatprep.subr.mxu0 0.0
    %1888 = vmatpush1.msra.mxu0 0.0
    %1889 = vmatprep.subr.mxu0 0.0
    %1890 = vmatpush1.msra.mxu0 0.0
    %1891 = vmatprep.subr.mxu0 0.0
    %1892 = vmatpush1.msra.mxu0 0.0
    %1893 = vmatprep.subr.mxu0 0.0
    %1894 = vmatpush1.msra.mxu0 0.0
    %1895 = vmatprep.subr.mxu0 0.0
    %1896 = vmatpush1.msra.mxu0 %v40
    %1897 = vmatprep.subr.mxu0 0.0
    %1898 = vmatpush2.msra.mxu0 0.0
    %1899 = vmatprep.subr.mxu0 0.0
    %1900 = vmatpush2.msra.mxu0 0.0
    %1901 = vmatprep.subr.mxu0 0.0
    %1902 = vmatpush2.msra.mxu0 0.0
    %1903 = vmatprep.subr.mxu0 0.0
    %1904 = vmatpush2.msra.mxu0 0.0
    %1905 = vmatprep.subr.mxu0 0.0
    %1906 = vmatpush2.msra.mxu0 0.0
    %1907 = vmatprep.subr.mxu0 0.0
    %1908 = vmatpush2.msra.mxu0 0.0
    %1909 = vmatprep.subr.mxu0 0.0
    %1910 = vmatpush2.msra.mxu0 0.0
    %1911 = vmatprep.subr.mxu0 0.0
    %1912 = vmatpush2.msra.mxu0 0.0
    %1913 = vmatprep.subr.mxu0 0.0
    %1914 = vmatpush2.msra.mxu0 0.0
    %1915 = vmatprep.subr.mxu0 0.0
    %1916 = vmatpush2.msra.mxu0 0.0
    %1917 = vmatprep.subr.mxu0 0.0
    %1918 = vmatpush2.msra.mxu0 0.0
    %1919 = vmatprep.subr.mxu0 0.0
    %1920 = vmatpush2.msra.mxu0 0.0
    %1921 = vmatprep.subr.mxu0 0.0
    %1922 = vmatpush2.msra.mxu0 0.0
    %1923 = vmatprep.subr.mxu0 0.0
    %1924 = vmatpush2.msra.mxu0 0.0
    %1925 = vmatprep.subr.mxu0 0.0
    %1926 = vmatpush2.msra.mxu0 0.0
    %1927 = vmatprep.subr.mxu0 0.0
    %1928 = vmatpush2.msra.mxu0 0.0
    %1929 = vmatprep.mubr.f32.mxu0 0.0
    %1930 = vmatmul.mubr.f32.gmra.mxu0 %v1681
    %v1931 = vpop.f32.mrf.mxu0
    %v1932 = vadd.f32 0.0, %v1931
    %v1933 = vpop.f32.mrf.mxu0
    %1934 = vdwg.mxu0
    %v1936 = vrot.slane %v1932, 2
    %v1938 = vadd.f32 %v123, %v1936
    %v1939 = vxor.u32 %v1938, 2147483648
    %v1940 = vmul.f32 %v1939, 1.442695
    %v1941 = vpow.pop %v1940
    %v1942 = vadd.f32 %v1941, 1.0
    %v1943 = vrcp.pop %v1942
    %v1944 = vmul.f32 1.0, %v1943
    %v1945 = vmul.f32 %v1944, 2.0
    %v1946 = vsub.f32 %v1945, 1.0
    %v1948 = vrot.slane %v1670, 7
    %v1950 = vmul.f32 %v1944, %v1948
    %1952 = vrot.lane.b32.xlu0 %v1946, 112
    %v1953 = vpop.permute.xlu0 %1952
    %v1955 = vmul.f32 %v1944, %v1953
    %1957 = vrot.lane.b32.xlu0 %v1955, 8
    %v1958 = vpop.permute.xlu0 %1957
    %v1960 = vadd.f32 %v1950, %v1958
    %v1961 = vtanh.pop %v1960
    %1963 = vrot.lane.b32.xlu0 %v1961, 16
    %v1964 = vpop.permute.xlu0 %1963
    %v1966 = vmul.f32 %v1944, %v1964
    %v1968 = vrot.slane %v1966, 6
    %1969 = vrot.lane.b32.xlu0 %v1968, 104
    %v1970 = vpop.permute.xlu0 %1969
    %v1971 = vsel %vm128, %v1970, 0
    %1973 = vmatprep.subr.mxu0 0.0
    %1974 = vmatpush1.msra.mxu0 0.0
    %1975 = vmatprep.subr.mxu0 0.0
    %1976 = vmatpush1.msra.mxu0 0.0
    %1977 = vmatprep.subr.mxu0 0.0
    %1978 = vmatpush1.msra.mxu0 0.0
    %1979 = vmatprep.subr.mxu0 0.0
    %1980 = vmatpush1.msra.mxu0 0.0
    %1981 = vmatprep.subr.mxu0 0.0
    %1982 = vmatpush1.msra.mxu0 0.0
    %1983 = vmatprep.subr.mxu0 0.0
    %1984 = vmatpush1.msra.mxu0 0.0
    %1985 = vmatprep.subr.mxu0 0.0
    %1986 = vmatpush1.msra.mxu0 0.0
    %1987 = vmatprep.subr.mxu0 0.0
    %1988 = vmatpush1.msra.mxu0 0.0
    %1989 = vmatprep.subr.mxu0 0.0
    %1990 = vmatpush1.msra.mxu0 0.0
    %1991 = vmatprep.subr.mxu0 0.0
    %1992 = vmatpush1.msra.mxu0 0.0
    %1993 = vmatprep.subr.mxu0 0.0
    %1994 = vmatpush1.msra.mxu0 0.0
    %1995 = vmatprep.subr.mxu0 0.0
    %1996 = vmatpush1.msra.mxu0 0.0
    %1997 = vmatprep.subr.mxu0 0.0
    %1998 = vmatpush1.msra.mxu0 0.0
    %1999 = vmatprep.subr.mxu0 0.0
    %2000 = vmatpush1.msra.mxu0 0.0
    %2001 = vmatprep.subr.mxu0 0.0
    %2002 = vmatpush1.msra.mxu0 0.0
    %2003 = vmatprep.subr.mxu0 0.0
    %2004 = vmatpush1.msra.mxu0 %v41
    %2005 = vmatprep.subr.mxu0 0.0
    %2006 = vmatpush2.msra.mxu0 0.0
    %2007 = vmatprep.subr.mxu0 0.0
    %2008 = vmatpush2.msra.mxu0 0.0
    %2009 = vmatprep.subr.mxu0 0.0
    %2010 = vmatpush2.msra.mxu0 0.0
    %2011 = vmatprep.subr.mxu0 0.0
    %2012 = vmatpush2.msra.mxu0 0.0
    %2013 = vmatprep.subr.mxu0 0.0
    %2014 = vmatpush2.msra.mxu0 0.0
    %2015 = vmatprep.subr.mxu0 0.0
    %2016 = vmatpush2.msra.mxu0 0.0
    %2017 = vmatprep.subr.mxu0 0.0
    %2018 = vmatpush2.msra.mxu0 0.0
    %2019 = vmatprep.subr.mxu0 0.0
    %2020 = vmatpush2.msra.mxu0 0.0
    %2021 = vmatprep.subr.mxu0 0.0
    %2022 = vmatpush2.msra.mxu0 0.0
    %2023 = vmatprep.subr.mxu0 0.0
    %2024 = vmatpush2.msra.mxu0 0.0
    %2025 = vmatprep.subr.mxu0 0.0
    %2026 = vmatpush2.msra.mxu0 0.0
    %2027 = vmatprep.subr.mxu0 0.0
    %2028 = vmatpush2.msra.mxu0 0.0
    %2029 = vmatprep.subr.mxu0 0.0
    %2030 = vmatpush2.msra.mxu0 0.0
    %2031 = vmatprep.subr.mxu0 0.0
    %2032 = vmatpush2.msra.mxu0 0.0
    %2033 = vmatprep.subr.mxu0 0.0
    %2034 = vmatpush2.msra.mxu0 0.0
    %2035 = vmatprep.subr.mxu0 0.0
    %2036 = vmatpush2.msra.mxu0 0.0
    %2037 = vmatprep.mubr.f32.mxu0 0.0
    %2038 = vmatmul.mubr.f32.gmra.mxu0 %v1971
    %v2039 = vpop.f32.mrf.mxu0
    %v2040 = vadd.f32 %v44, %v2039
    %v2041 = vpop.f32.mrf.mxu0
    %2042 = vdwg.mxu0
    %2044 = vrot.lane.b32.xlu0 %v1853, 104
    %v2045 = vpop.permute.xlu0 %2044
    %v2046 = vsel %vm128, %v2045, 0
    %2048 = vmatprep.subr.mxu0 0.0
    %2049 = vmatpush1.msra.mxu0 0.0
    %2050 = vmatprep.subr.mxu0 0.0
    %2051 = vmatpush1.msra.mxu0 0.0
    %2052 = vmatprep.subr.mxu0 0.0
    %2053 = vmatpush1.msra.mxu0 0.0
    %2054 = vmatprep.subr.mxu0 0.0
    %2055 = vmatpush1.msra.mxu0 0.0
    %2056 = vmatprep.subr.mxu0 0.0
    %2057 = vmatpush1.msra.mxu0 0.0
    %2058 = vmatprep.subr.mxu0 0.0
    %2059 = vmatpush1.msra.mxu0 0.0
    %2060 = vmatprep.subr.mxu0 0.0
    %2061 = vmatpush1.msra.mxu0 0.0
    %2062 = vmatprep.subr.mxu0 0.0
    %2063 = vmatpush1.msra.mxu0 0.0
    %2064 = vmatprep.subr.mxu0 0.0
    %2065 = vmatpush1.msra.mxu0 0.0
    %2066 = vmatprep.subr.mxu0 0.0
    %2067 = vmatpush1.msra.mxu0 0.0
    %2068 = vmatprep.subr.mxu0 0.0
    %2069 = vmatpush1.msra.mxu0 0.0
    %2070 = vmatprep.subr.mxu0 0.0
    %2071 = vmatpush1.msra.mxu0 0.0
    %2072 = vmatprep.subr.mxu0 0.0
    %2073 = vmatpush1.msra.mxu0 0.0
    %2074 = vmatprep.subr.mxu0 0.0
    %2075 = vmatpush1.msra.mxu0 0.0
    %2076 = vmatprep.subr.mxu0 0.0
    %2077 = vmatpush1.msra.mxu0 0.0
    %2078 = vmatprep.subr.mxu0 0.0
    %2079 = vmatpush1.msra.mxu0 %v42
    %2080 = vmatprep.subr.mxu0 0.0
    %2081 = vmatpush2.msra.mxu0 0.0
    %2082 = vmatprep.subr.mxu0 0.0
    %2083 = vmatpush2.msra.mxu0 0.0
    %2084 = vmatprep.subr.mxu0 0.0
    %2085 = vmatpush2.msra.mxu0 0.0
    %2086 = vmatprep.subr.mxu0 0.0
    %2087 = vmatpush2.msra.mxu0 0.0
    %2088 = vmatprep.subr.mxu0 0.0
    %2089 = vmatpush2.msra.mxu0 0.0
    %2090 = vmatprep.subr.mxu0 0.0
    %2091 = vmatpush2.msra.mxu0 0.0
    %2092 = vmatprep.subr.mxu0 0.0
    %2093 = vmatpush2.msra.mxu0 0.0
    %2094 = vmatprep.subr.mxu0 0.0
    %2095 = vmatpush2.msra.mxu0 0.0
    %2096 = vmatprep.subr.mxu0 0.0
    %2097 = vmatpush2.msra.mxu0 0.0
    %2098 = vmatprep.subr.mxu0 0.0
    %2099 = vmatpush2.msra.mxu0 0.0
    %2100 = vmatprep.subr.mxu0 0.0
    %2101 = vmatpush2.msra.mxu0 0.0
    %2102 = vmatprep.subr.mxu0 0.0
    %2103 = vmatpush2.msra.mxu0 0.0
    %2104 = vmatprep.subr.mxu0 0.0
    %2105 = vmatpush2.msra.mxu0 0.0
    %2106 = vmatprep.subr.mxu0 0.0
    %2107 = vmatpush2.msra.mxu0 0.0
    %2108 = vmatprep.subr.mxu0 0.0
    %2109 = vmatpush2.msra.mxu0 0.0
    %2110 = vmatprep.subr.mxu0 0.0
    %2111 = vmatpush2.msra.mxu0 0.0
    %2112 = vmatprep.mubr.f32.mxu0 0.0
    %2113 = vmatmul.mubr.f32.gmra.mxu0 %v2046
    %v2114 = vpop.f32.mrf.mxu0
    %v2115 = vadd.f32 0.0, %v2114
    %v2116 = vpop.f32.mrf.mxu0
    %2117 = vdwg.mxu0
    %v2118 = vadd.f32 %v2040, %v2115
    %v2119 = vxor.u32 %v2118, 2147483648
    %v2120 = vmul.f32 %v2119, 1.442695
    %v2121 = vpow.pop %v2120
    %v2122 = vadd.f32 %v2121, 1.0
    %v2123 = vrcp.pop %v2122
    %v2124 = vmul.f32 1.0, %v2123
    %v2125 = vmul.f32 %v2124, 2.0
    %v2126 = vsub.f32 %v2125, 1.0
    %v2127 = vmul.f32 %v2124, %v1847
    %2129 = vrot.lane.b32.xlu0 %v2126, 112
    %v2130 = vpop.permute.xlu0 %2129
    %v2132 = vmul.f32 %v2124, %v2130
    %2134 = vrot.lane.b32.xlu0 %v2132, 8
    %v2135 = vpop.permute.xlu0 %2134
    %v2137 = vadd.f32 %v2127, %v2135
    %v2138 = vtanh.pop %v2137
    %2140 = vrot.lane.b32.xlu0 %v2138, 16
    %v2141 = vpop.permute.xlu0 %2140
    %v2143 = vmul.f32 %v2124, %v2141
    %v2144 = vmax.f32 %v2143, 0.0
    %v2145 = vmul.f32 %v2144, %v402
    %2147 = vrot.lane.b32.xlu0 %v2145, 104
    %v2148 = vpop.permute.xlu0 %2147
    %v2150 = vsel %vm409, %v2148, 0.0
    %2151 = vadd.xlane.f32.xlu0 %v2150
    %v2152 = vpop.xlane.xlu0 %2151
    %vm2153 = vcmp.eq.s32.totalorder %v127, 6
    %v2154 = vsel %vm2153, %v2152, %v1864
    %2155 = vmatprep.subr.mxu0 0.0
    %2156 = vmatpush1.msra.mxu0 0.0
    %2157 = vmatprep.subr.mxu0 0.0
    %2158 = vmatpush1.msra.mxu0 0.0
    %2159 = vmatprep.subr.mxu0 0.0
    %2160 = vmatpush1.msra.mxu0 0.0
    %2161 = vmatprep.subr.mxu0 0.0
    %2162 = vmatpush1.msra.mxu0 0.0
    %2163 = vmatprep.subr.mxu0 0.0
    %2164 = vmatpush1.msra.mxu0 0.0
    %2165 = vmatprep.subr.mxu0 0.0
    %2166 = vmatpush1.msra.mxu0 0.0
    %2167 = vmatprep.subr.mxu0 0.0
    %2168 = vmatpush1.msra.mxu0 0.0
    %2169 = vmatprep.subr.mxu0 0.0
    %2170 = vmatpush1.msra.mxu0 0.0
    %2171 = vmatprep.subr.mxu0 0.0
    %2172 = vmatpush1.msra.mxu0 0.0
    %2173 = vmatprep.subr.mxu0 0.0
    %2174 = vmatpush1.msra.mxu0 0.0
    %2175 = vmatprep.subr.mxu0 0.0
    %2176 = vmatpush1.msra.mxu0 0.0
    %2177 = vmatprep.subr.mxu0 0.0
    %2178 = vmatpush1.msra.mxu0 0.0
    %2179 = vmatprep.subr.mxu0 0.0
    %2180 = vmatpush1.msra.mxu0 0.0
    %2181 = vmatprep.subr.mxu0 0.0
    %2182 = vmatpush1.msra.mxu0 0.0
    %2183 = vmatprep.subr.mxu0 0.0
    %2184 = vmatpush1.msra.mxu0 0.0
    %2185 = vmatprep.subr.mxu0 0.0
    %2186 = vmatpush1.msra.mxu0 %v40
    %2187 = vmatprep.subr.mxu0 0.0
    %2188 = vmatpush2.msra.mxu0 0.0
    %2189 = vmatprep.subr.mxu0 0.0
    %2190 = vmatpush2.msra.mxu0 0.0
    %2191 = vmatprep.subr.mxu0 0.0
    %2192 = vmatpush2.msra.mxu0 0.0
    %2193 = vmatprep.subr.mxu0 0.0
    %2194 = vmatpush2.msra.mxu0 0.0
    %2195 = vmatprep.subr.mxu0 0.0
    %2196 = vmatpush2.msra.mxu0 0.0
    %2197 = vmatprep.subr.mxu0 0.0
    %2198 = vmatpush2.msra.mxu0 0.0
    %2199 = vmatprep.subr.mxu0 0.0
    %2200 = vmatpush2.msra.mxu0 0.0
    %2201 = vmatprep.subr.mxu0 0.0
    %2202 = vmatpush2.msra.mxu0 0.0
    %2203 = vmatprep.subr.mxu0 0.0
    %2204 = vmatpush2.msra.mxu0 0.0
    %2205 = vmatprep.subr.mxu0 0.0
    %2206 = vmatpush2.msra.mxu0 0.0
    %2207 = vmatprep.subr.mxu0 0.0
    %2208 = vmatpush2.msra.mxu0 0.0
    %2209 = vmatprep.subr.mxu0 0.0
    %2210 = vmatpush2.msra.mxu0 0.0
    %2211 = vmatprep.subr.mxu0 0.0
    %2212 = vmatpush2.msra.mxu0 0.0
    %2213 = vmatprep.subr.mxu0 0.0
    %2214 = vmatpush2.msra.mxu0 0.0
    %2215 = vmatprep.subr.mxu0 0.0
    %2216 = vmatpush2.msra.mxu0 0.0
    %2217 = vmatprep.subr.mxu0 0.0
    %2218 = vmatpush2.msra.mxu0 0.0
    %2219 = vmatprep.mubr.f32.mxu0 0.0
    %2220 = vmatmul.mubr.f32.gmra.mxu0 %v1971
    %v2221 = vpop.f32.mrf.mxu0
    %v2222 = vadd.f32 0.0, %v2221
    %v2223 = vpop.f32.mrf.mxu0
    %2224 = vdwg.mxu0
    %v2226 = vrot.slane %v2222, 1
    %v2228 = vadd.f32 %v123, %v2226
    %v2229 = vxor.u32 %v2228, 2147483648
    %v2230 = vmul.f32 %v2229, 1.442695
    %v2231 = vpow.pop %v2230
    %v2232 = vadd.f32 %v2231, 1.0
    %v2233 = vrcp.pop %v2232
    %v2234 = vmul.f32 1.0, %v2233
    %v2235 = vmul.f32 %v2234, 2.0
    %v2236 = vsub.f32 %v2235, 1.0
    %v2238 = vrot.slane %v1960, 7
    %v2240 = vmul.f32 %v2234, %v2238
    %2242 = vrot.lane.b32.xlu0 %v2236, 112
    %v2243 = vpop.permute.xlu0 %2242
    %v2245 = vmul.f32 %v2234, %v2243
    %2247 = vrot.lane.b32.xlu0 %v2245, 8
    %v2248 = vpop.permute.xlu0 %2247
    %v2250 = vadd.f32 %v2240, %v2248
    %v2251 = vtanh.pop %v2250
    %2253 = vrot.lane.b32.xlu0 %v2251, 16
    %v2254 = vpop.permute.xlu0 %2253
    %v2256 = vmul.f32 %v2234, %v2254
    %v2258 = vrot.slane %v2256, 7
    %2259 = vrot.lane.b32.xlu0 %v2258, 104
    %v2260 = vpop.permute.xlu0 %2259
    %v2261 = vsel %vm128, %v2260, 0
    %2263 = vmatprep.subr.mxu0 0.0
    %2264 = vmatpush1.msra.mxu0 0.0
    %2265 = vmatprep.subr.mxu0 0.0
    %2266 = vmatpush1.msra.mxu0 0.0
    %2267 = vmatprep.subr.mxu0 0.0
    %2268 = vmatpush1.msra.mxu0 0.0
    %2269 = vmatprep.subr.mxu0 0.0
    %2270 = vmatpush1.msra.mxu0 0.0
    %2271 = vmatprep.subr.mxu0 0.0
    %2272 = vmatpush1.msra.mxu0 0.0
    %2273 = vmatprep.subr.mxu0 0.0
    %2274 = vmatpush1.msra.mxu0 0.0
    %2275 = vmatprep.subr.mxu0 0.0
    %2276 = vmatpush1.msra.mxu0 0.0
    %2277 = vmatprep.subr.mxu0 0.0
    %2278 = vmatpush1.msra.mxu0 0.0
    %2279 = vmatprep.subr.mxu0 0.0
    %2280 = vmatpush1.msra.mxu0 0.0
    %2281 = vmatprep.subr.mxu0 0.0
    %2282 = vmatpush1.msra.mxu0 0.0
    %2283 = vmatprep.subr.mxu0 0.0
    %2284 = vmatpush1.msra.mxu0 0.0
    %2285 = vmatprep.subr.mxu0 0.0
    %2286 = vmatpush1.msra.mxu0 0.0
    %2287 = vmatprep.subr.mxu0 0.0
    %2288 = vmatpush1.msra.mxu0 0.0
    %2289 = vmatprep.subr.mxu0 0.0
    %2290 = vmatpush1.msra.mxu0 0.0
    %2291 = vmatprep.subr.mxu0 0.0
    %2292 = vmatpush1.msra.mxu0 0.0
    %2293 = vmatprep.subr.mxu0 0.0
    %2294 = vmatpush1.msra.mxu0 %v41
    %2295 = vmatprep.subr.mxu0 0.0
    %2296 = vmatpush2.msra.mxu0 0.0
    %2297 = vmatprep.subr.mxu0 0.0
    %2298 = vmatpush2.msra.mxu0 0.0
    %2299 = vmatprep.subr.mxu0 0.0
    %2300 = vmatpush2.msra.mxu0 0.0
    %2301 = vmatprep.subr.mxu0 0.0
    %2302 = vmatpush2.msra.mxu0 0.0
    %2303 = vmatprep.subr.mxu0 0.0
    %2304 = vmatpush2.msra.mxu0 0.0
    %2305 = vmatprep.subr.mxu0 0.0
    %2306 = vmatpush2.msra.mxu0 0.0
    %2307 = vmatprep.subr.mxu0 0.0
    %2308 = vmatpush2.msra.mxu0 0.0
    %2309 = vmatprep.subr.mxu0 0.0
    %2310 = vmatpush2.msra.mxu0 0.0
    %2311 = vmatprep.subr.mxu0 0.0
    %2312 = vmatpush2.msra.mxu0 0.0
    %2313 = vmatprep.subr.mxu0 0.0
    %2314 = vmatpush2.msra.mxu0 0.0
    %2315 = vmatprep.subr.mxu0 0.0
    %2316 = vmatpush2.msra.mxu0 0.0
    %2317 = vmatprep.subr.mxu0 0.0
    %2318 = vmatpush2.msra.mxu0 0.0
    %2319 = vmatprep.subr.mxu0 0.0
    %2320 = vmatpush2.msra.mxu0 0.0
    %2321 = vmatprep.subr.mxu0 0.0
    %2322 = vmatpush2.msra.mxu0 0.0
    %2323 = vmatprep.subr.mxu0 0.0
    %2324 = vmatpush2.msra.mxu0 0.0
    %2325 = vmatprep.subr.mxu0 0.0
    %2326 = vmatpush2.msra.mxu0 0.0
    %2327 = vmatprep.mubr.f32.mxu0 0.0
    %2328 = vmatmul.mubr.f32.gmra.mxu0 %v2261
    %v2329 = vpop.f32.mrf.mxu0
    %v2330 = vadd.f32 %v44, %v2329
    %v2331 = vpop.f32.mrf.mxu0
    %2332 = vdwg.mxu0
    %2334 = vrot.lane.b32.xlu0 %v2143, 104
    %v2335 = vpop.permute.xlu0 %2334
    %v2336 = vsel %vm128, %v2335, 0
    %2338 = vmatprep.subr.mxu0 0.0
    %2339 = vmatpush1.msra.mxu0 0.0
    %2340 = vmatprep.subr.mxu0 0.0
    %2341 = vmatpush1.msra.mxu0 0.0
    %2342 = vmatprep.subr.mxu0 0.0
    %2343 = vmatpush1.msra.mxu0 0.0
    %2344 = vmatprep.subr.mxu0 0.0
    %2345 = vmatpush1.msra.mxu0 0.0
    %2346 = vmatprep.subr.mxu0 0.0
    %2347 = vmatpush1.msra.mxu0 0.0
    %2348 = vmatprep.subr.mxu0 0.0
    %2349 = vmatpush1.msra.mxu0 0.0
    %2350 = vmatprep.subr.mxu0 0.0
    %2351 = vmatpush1.msra.mxu0 0.0
    %2352 = vmatprep.subr.mxu0 0.0
    %2353 = vmatpush1.msra.mxu0 0.0
    %2354 = vmatprep.subr.mxu0 0.0
    %2355 = vmatpush1.msra.mxu0 0.0
    %2356 = vmatprep.subr.mxu0 0.0
    %2357 = vmatpush1.msra.mxu0 0.0
    %2358 = vmatprep.subr.mxu0 0.0
    %2359 = vmatpush1.msra.mxu0 0.0
    %2360 = vmatprep.subr.mxu0 0.0
    %2361 = vmatpush1.msra.mxu0 0.0
    %2362 = vmatprep.subr.mxu0 0.0
    %2363 = vmatpush1.msra.mxu0 0.0
    %2364 = vmatprep.subr.mxu0 0.0
    %2365 = vmatpush1.msra.mxu0 0.0
    %2366 = vmatprep.subr.mxu0 0.0
    %2367 = vmatpush1.msra.mxu0 0.0
    %2368 = vmatprep.subr.mxu0 0.0
    %2369 = vmatpush1.msra.mxu0 %v42
    %2370 = vmatprep.subr.mxu0 0.0
    %2371 = vmatpush2.msra.mxu0 0.0
    %2372 = vmatprep.subr.mxu0 0.0
    %2373 = vmatpush2.msra.mxu0 0.0
    %2374 = vmatprep.subr.mxu0 0.0
    %2375 = vmatpush2.msra.mxu0 0.0
    %2376 = vmatprep.subr.mxu0 0.0
    %2377 = vmatpush2.msra.mxu0 0.0
    %2378 = vmatprep.subr.mxu0 0.0
    %2379 = vmatpush2.msra.mxu0 0.0
    %2380 = vmatprep.subr.mxu0 0.0
    %2381 = vmatpush2.msra.mxu0 0.0
    %2382 = vmatprep.subr.mxu0 0.0
    %2383 = vmatpush2.msra.mxu0 0.0
    %2384 = vmatprep.subr.mxu0 0.0
    %2385 = vmatpush2.msra.mxu0 0.0
    %2386 = vmatprep.subr.mxu0 0.0
    %2387 = vmatpush2.msra.mxu0 0.0
    %2388 = vmatprep.subr.mxu0 0.0
    %2389 = vmatpush2.msra.mxu0 0.0
    %2390 = vmatprep.subr.mxu0 0.0
    %2391 = vmatpush2.msra.mxu0 0.0
    %2392 = vmatprep.subr.mxu0 0.0
    %2393 = vmatpush2.msra.mxu0 0.0
    %2394 = vmatprep.subr.mxu0 0.0
    %2395 = vmatpush2.msra.mxu0 0.0
    %2396 = vmatprep.subr.mxu0 0.0
    %2397 = vmatpush2.msra.mxu0 0.0
    %2398 = vmatprep.subr.mxu0 0.0
    %2399 = vmatpush2.msra.mxu0 0.0
    %2400 = vmatprep.subr.mxu0 0.0
    %2401 = vmatpush2.msra.mxu0 0.0
    %2402 = vmatprep.mubr.f32.mxu0 0.0
    %2403 = vmatmul.mubr.f32.gmra.mxu0 %v2336
    %v2404 = vpop.f32.mrf.mxu0
    %v2405 = vadd.f32 0.0, %v2404
    %v2406 = vpop.f32.mrf.mxu0
    %2407 = vdwg.mxu0
    %v2408 = vadd.f32 %v2330, %v2405
    %v2409 = vxor.u32 %v2408, 2147483648
    %v2410 = vmul.f32 %v2409, 1.442695
    %v2411 = vpow.pop %v2410
    %v2412 = vadd.f32 %v2411, 1.0
    %v2413 = vrcp.pop %v2412
    %v2414 = vmul.f32 1.0, %v2413
    %v2415 = vmul.f32 %v2414, 2.0
    %v2416 = vsub.f32 %v2415, 1.0
    %v2417 = vmul.f32 %v2414, %v2137
    %2419 = vrot.lane.b32.xlu0 %v2416, 112
    %v2420 = vpop.permute.xlu0 %2419
    %v2422 = vmul.f32 %v2414, %v2420
    %2424 = vrot.lane.b32.xlu0 %v2422, 8
    %v2425 = vpop.permute.xlu0 %2424
    %v2427 = vadd.f32 %v2417, %v2425
    %v2428 = vtanh.pop %v2427
    %2430 = vrot.lane.b32.xlu0 %v2428, 16
    %v2431 = vpop.permute.xlu0 %2430
    %v2433 = vmul.f32 %v2414, %v2431
    %v2434 = vmax.f32 %v2433, 0.0
    %v2435 = vmul.f32 %v2434, %v402
    %2437 = vrot.lane.b32.xlu0 %v2435, 104
    %v2438 = vpop.permute.xlu0 %2437
    %v2440 = vsel %vm409, %v2438, 0.0
    %2441 = vadd.xlane.f32.xlu0 %v2440
    %v2442 = vpop.xlane.xlu0 %2441
    %vm2443 = vcmp.eq.s32.totalorder %v127, 7
    %v2444 = vsel %vm2443, %v2442, %v2154
    %2446 = vset.pattern.permute.xlu0 0
    %2447 = vperm.xlu0 %2446, %v46
    %v2448 = vpop.permute.xlu0 %2447
    %v2450 = vadd.f32 %v2444, %v2448
    %2451 = vst.msk [vmem:[#allocation7] sm:$0x1] %vm409, %v2450
    // Predicated region
    $region18: #{tpu_custom_call.1} parent=1 // pred_check
      _
    $region19: #{tpu_custom_call.1} parent=1 // pred_check_branch
      %2453 = sbr.rel (0) target = $region21
    $region20: #{tpu_custom_call.1} parent=1 // pred_region
      %s2455 = ssub.s32 16, 16
      %2456 = vsyncadd [#allocation4], %s2455
      %s2458 = sshll.u32 [#allocation7], 4
      %s2459 = int_to_ptr.vmem [resolvable:$true] %s2458
      %2461 = dma.vmem_to_hbm [thread:$0]  %s2459, 16, %s2, [#allocation4]
    $region21: #{tpu_custom_call.1} parent=1 // pred_fallthru
      _
    // Predicated region
    $region22: #{tpu_custom_call.1} parent=1 // pred_check
      _
    $region23: #{tpu_custom_call.1} parent=1 // pred_check_branch
      %2463 = sbr.rel (0) target = $region25
    $region24: #{tpu_custom_call.1} parent=1 // pred_region
      %2464 = dma.done [#allocation4], 16
    $region25: #{tpu_custom_call.1} parent=1 // pred_fallthru
      _
    %2465 = vsyncpa [#allocation3], 1
    %2466 = vsyncpa [#allocation6], 1
    %2467 = vsyncpa [#allocation4], 1

</llo_original>
